<compile_context>
chip_gen: v7x
topology: tpu7x:2x2x1
jax: 0.10.0
libtpu: 0.0.40
codegen_flags: <defaults>
</compile_context>

<pallas_src>
import functools
import math

import jax
import jax.numpy as jnp
from jax import lax
from jax.experimental import pallas as pl
from jax.experimental.pallas import tpu as pltpu


def _transformer_layer_kernel(slopes_ref, x_ref, wq_ref, wk_ref, wv_ref,
                              wo_w_ref, wo_b_ref, ff1_w_ref, ff1_b_ref,
                              ff2_w_ref, ff2_b_ref,
                              sa_ref, out_ref, acc_ref, *, scale, alibi):
    h = pl.program_id(0)
    last = pl.num_programs(0) - 1

    @pl.when(h == 0)
    def _init():
        acc_ref[...] = jnp.zeros_like(acc_ref)

    x = x_ref[...].astype(jnp.float32)                       # (S, D), resident

    # Per-head projections (MXU, f32 accumulation).
    q = jnp.dot(x, wq_ref[0], preferred_element_type=jnp.float32)   # (S, Dk)
    k = jnp.dot(x, wk_ref[0], preferred_element_type=jnp.float32)   # (S, Dk)
    v = jnp.dot(x, wv_ref[0], preferred_element_type=jnp.float32)   # (S, Dv)

    # scores = Q @ K^T / sqrt(d_internal)
    scores = lax.dot_general(q, k, (((1,), (1,)), ((), ())),
                             preferred_element_type=jnp.float32) * scale   # (S, S)

    S = scores.shape[0]
    row = lax.broadcasted_iota(jnp.int32, (S, S), 0)
    col = lax.broadcasted_iota(jnp.int32, (S, S), 1)

    if alibi:
        slope = slopes_ref[h]                                 # scalar from SMEM
        scores = scores - jnp.maximum(row - col, 0).astype(jnp.float32) * slope

    # Causal mask (strict upper triangle -> -inf).
    scores = jnp.where(col <= row, scores, -jnp.inf)

    # Numerically-stable softmax over the last axis.
    m = jnp.max(scores, axis=-1, keepdims=True)
    e = jnp.exp(scores - m)
    p = e / jnp.sum(e, axis=-1, keepdims=True)                # (S, S)

    sa_ref[0] = p.astype(sa_ref.dtype)                        # per-head attention map

    # z_h = SA_h @ V_h, then accumulate this head's slice of the WO projection:
    # hstack + WO  ==  sum_h z_h @ WO[h*Dv:(h+1)*Dv, :]
    z = jnp.dot(p, v, preferred_element_type=jnp.float32)                 # (S, Dv)
    acc_ref[...] += jnp.dot(z, wo_w_ref[0], preferred_element_type=jnp.float32)

    @pl.when(h == last)
    def _finalize():
        att = x + acc_ref[...] + wo_b_ref[...]                             # (S, D)
        hdn = jnp.maximum(
            jnp.dot(att, ff1_w_ref[...], preferred_element_type=jnp.float32)
            + ff1_b_ref[...], 0.0)                                         # (S, F)
        out = (att
               + jnp.dot(hdn, ff2_w_ref[...], preferred_element_type=jnp.float32)
               + ff2_b_ref[...])
        out_ref[...] = out.astype(out_ref.dtype)


def transformer_layer(x, wq, wk, wv, wo_w, wo_b, ff1_w, ff1_b, ff2_w, ff2_b, *,
                      position_style="none", d_internal=None):
    """x: (S, D).  wq/wk: (H, D, Dk).  wv: (H, D, Dv).  wo_w: (H*Dv, D).
    ff1_w: (D, F).  ff2_w: (F, D).  Biases are 1-D.
    Returns (SA (H, S, S), output_vecs (S, D))."""
    S, D = x.shape
    H, _, Dk = wq.shape
    Dv = wv.shape[-1]
    F = ff1_w.shape[-1]
    if d_internal is None:
        d_internal = Dk
    scale = 1.0 / math.sqrt(d_internal)
    alibi = (position_style == "alibi")

    # Per-head ALiBi slopes (tiny, SMEM); unused (but still passed) when alibi=False.
    slopes = jnp.array([(2.0 ** (-8.0 / H)) ** i for i in range(1, H + 1)],
                       dtype=jnp.float32)

    wo_w_h = wo_w.reshape(H, Dv, D)      # per-head row-slices of the WO projection
    wo_b2 = wo_b.reshape(1, D)
    ff1_b2 = ff1_b.reshape(1, F)
    ff2_b2 = ff2_b.reshape(1, D)

    kernel = functools.partial(_transformer_layer_kernel, scale=scale, alibi=alibi)

    grid_spec = pltpu.PrefetchScalarGridSpec(
        num_scalar_prefetch=0,
        grid=(H,),
        in_specs=[
            pl.BlockSpec(memory_space=pltpu.MemorySpace.SMEM),      # slopes (H,)
            pl.BlockSpec((S, D), lambda h: (0, 0)),                 # x (resident)
            pl.BlockSpec((1, D, Dk), lambda h: (h, 0, 0)),          # WQ[h]
            pl.BlockSpec((1, D, Dk), lambda h: (h, 0, 0)),          # WK[h]
            pl.BlockSpec((1, D, Dv), lambda h: (h, 0, 0)),          # WV[h]
            pl.BlockSpec((1, Dv, D), lambda h: (h, 0, 0)),          # WO rows for head h
            pl.BlockSpec((1, D), lambda h: (0, 0)),                 # WO bias
            pl.BlockSpec((D, F), lambda h: (0, 0)),                 # FF1 weight
            pl.BlockSpec((1, F), lambda h: (0, 0)),                 # FF1 bias
            pl.BlockSpec((F, D), lambda h: (0, 0)),                 # FF2 weight
            pl.BlockSpec((1, D), lambda h: (0, 0)),                 # FF2 bias
        ],
        out_specs=[
            pl.BlockSpec((1, S, S), lambda h: (h, 0, 0)),           # SA per head
            pl.BlockSpec((S, D), lambda h: (0, 0)),                 # output_vecs
        ],
        scratch_shapes=[pltpu.VMEM((S, D), jnp.float32)],           # WO accumulator
    )

    sa, out = pl.pallas_call(
        kernel,
        grid_spec=grid_spec,
        out_shape=(jax.ShapeDtypeStruct((H, S, S), jnp.float32),
                   jax.ShapeDtypeStruct((S, D), x.dtype)),
        compiler_params=pltpu.CompilerParams(
            dimension_semantics=("arbitrary",)),                    # sequential head accum
    )(slopes, x, wq, wk, wv, wo_w_h, wo_b2, ff1_w, ff1_b2, ff2_w, ff2_b2)
    return sa, out


def _reference(x, wq, wk, wv, wo_w, wo_b, ff1_w, ff1_b, ff2_w, ff2_b, *,
               position_style, d_internal):
    """Pure-JAX reference mirroring TransformerLayer.forward."""
    HI = lax.Precision.HIGHEST
    H = wq.shape[0]
    S = x.shape[0]
    q = jnp.einsum("sd,hdk->hsk", x, wq, precision=HI)
    k = jnp.einsum("sd,hdk->hsk", x, wk, precision=HI)
    v = jnp.einsum("sd,hdv->hsv", x, wv, precision=HI)
    scores = jnp.einsum("hsk,htk->hst", q, k, precision=HI) / math.sqrt(d_internal)
    i_idx = jnp.arange(S)[:, None]
    j_idx = jnp.arange(S)[None, :]
    mask = jnp.where(j_idx > i_idx, -jnp.inf, 0.0)
    if position_style == "alibi":
        slopes = jnp.array([(2.0 ** (-8.0 / H)) ** i for i in range(1, H + 1)],
                           dtype=jnp.float32)
        bias = -jnp.maximum(i_idx - j_idx, 0).astype(jnp.float32)
        scores = scores + slopes[:, None, None] * bias[None]
    sa = jax.nn.softmax(scores + mask[None], axis=-1)
    z = jnp.einsum("hst,htv->hsv", sa, v, precision=HI)
    zc = jnp.swapaxes(z, 0, 1).reshape(S, -1)        # hstack over heads -> (S, H*Dv)
    att = x + jnp.matmul(zc, wo_w, precision=HI) + wo_b
    hdn = jnp.maximum(jnp.matmul(att, ff1_w, precision=HI) + ff1_b, 0.0)
    out = att + jnp.matmul(hdn, ff2_w, precision=HI) + ff2_b
    return sa, out


if __name__ == "__main__":
    # Small shapes consistent with the module.
    S, D, Dk, Dv, F, H = 16, 32, 16, 16, 64, 2

    key = jax.random.PRNGKey(0)
    ks = jax.random.split(key, 10)

    def xavier(k, shape, fan_in, fan_out):
        limit = math.sqrt(6.0 / (fan_in + fan_out))
        return jax.random.uniform(k, shape, jnp.float32, -limit, limit)

    x = jax.random.normal(ks[0], (S, D), dtype=jnp.float32)
    wq = xavier(ks[1], (H, D, Dk), D, Dk)
    wk = xavier(ks[2], (H, D, Dk), D, Dk)
    wv = xavier(ks[3], (H, D, Dv), D, Dv)
    wo_w = xavier(ks[4], (H * Dv, D), H * Dv, D)
    wo_b = 0.5 * jax.random.normal(ks[5], (D,), dtype=jnp.float32)
    ff1_w = xavier(ks[6], (D, F), D, F)
    ff1_b = 0.5 * jax.random.normal(ks[7], (F,), dtype=jnp.float32)
    ff2_w = xavier(ks[8], (F, D), F, D)
    ff2_b = 0.5 * jax.random.normal(ks[9], (D,), dtype=jnp.float32)

    for style in ("none", "alibi"):
        sa, out = transformer_layer(x, wq, wk, wv, wo_w, wo_b,
                                    ff1_w, ff1_b, ff2_w, ff2_b,
                                    position_style=style, d_internal=Dk)
        sa, out = jax.block_until_ready((sa, out))

        sa_ref, out_ref = _reference(x, wq, wk, wv, wo_w, wo_b,
                                     ff1_w, ff1_b, ff2_w, ff2_b,
                                     position_style=style, d_internal=Dk)

        assert sa.shape == (H, S, S) and out.shape == (S, D)
        assert out.dtype == jnp.float32
        # Tolerance accounts for possible MXU f32 pass-count differences between the
        # Mosaic in-kernel matmuls and the XLA reference matmuls.
        assert jnp.allclose(sa, sa_ref, atol=5e-2, rtol=5e-2), f"SA mismatch ({style})"
        assert jnp.allclose(out, out_ref, atol=5e-2, rtol=5e-2), f"out mismatch ({style})"

    print("KERNEL_OK")
</pallas_src>

<mosaic_0001>
module attributes {stable_mosaic.version = 11 : i64} {
  func.func @_transformer_layer_kernel(%arg0: i32, %arg1: memref<2xf32, #tpu.memory_space<smem>>, %arg2: memref<16x32xf32, #tpu.memory_space<vmem>>, %arg3: memref<1x32x16xf32, #tpu.memory_space<vmem>>, %arg4: memref<1x32x16xf32, #tpu.memory_space<vmem>>, %arg5: memref<1x32x16xf32, #tpu.memory_space<vmem>>, %arg6: memref<1x16x32xf32, #tpu.memory_space<vmem>>, %arg7: memref<1x32xf32, #tpu.memory_space<vmem>>, %arg8: memref<32x64xf32, #tpu.memory_space<vmem>>, %arg9: memref<1x64xf32, #tpu.memory_space<vmem>>, %arg10: memref<64x32xf32, #tpu.memory_space<vmem>>, %arg11: memref<1x32xf32, #tpu.memory_space<vmem>>, %arg12: memref<1x16x16xf32, #tpu.memory_space<vmem>>, %arg13: memref<16x32xf32, #tpu.memory_space<vmem>>, %arg14: memref<16x32xf32, #tpu.memory_space<vmem>>) attributes {dimension_semantics = [#tpu.dimension_semantics<arbitrary>], iteration_bounds = array<i64: 2>, scalar_prefetch = 0 : i64, scratch_operands = 1 : i64, tpu.core_type = #tpu.core_type<tc>, window_params = [{transform_indices = @transform_0, window_bounds = array<i64: 2>}, {pipeline_mode = #tpu.pipeline_mode<synchronous>, transform_indices = @transform_1, window_bounds = array<i64: 16, 32>}, {transform_indices = @transform_2, window_bounds = array<i64: 1, 32, 16>}, {transform_indices = @transform_3, window_bounds = array<i64: 1, 32, 16>}, {transform_indices = @transform_4, window_bounds = array<i64: 1, 32, 16>}, {transform_indices = @transform_5, window_bounds = array<i64: 1, 16, 32>}, {pipeline_mode = #tpu.pipeline_mode<synchronous>, transform_indices = @transform_6, window_bounds = array<i64: 1, 32>}, {pipeline_mode = #tpu.pipeline_mode<synchronous>, transform_indices = @transform_7, window_bounds = array<i64: 32, 64>}, {pipeline_mode = #tpu.pipeline_mode<synchronous>, transform_indices = @transform_8, window_bounds = array<i64: 1, 64>}, {pipeline_mode = #tpu.pipeline_mode<synchronous>, transform_indices = @transform_9, window_bounds = array<i64: 64, 32>}, {pipeline_mode = #tpu.pipeline_mode<synchronous>, transform_indices = @transform_10, window_bounds = array<i64: 1, 32>}, {transform_indices = @transform_11, window_bounds = array<i64: 1, 16, 16>}, {pipeline_mode = #tpu.pipeline_mode<synchronous>, transform_indices = @transform_12, window_bounds = array<i64: 16, 32>}]} {
    %c0_i32 = arith.constant 0 : i32
    %0 = arith.cmpi eq, %arg0, %c0_i32 : i32
    %1 = arith.extui %0 : i1 to i32
    %c0_i32_0 = arith.constant 0 : i32
    %2 = arith.cmpi ne, %1, %c0_i32_0 : i32
    scf.if %2 {
      %cst_31 = arith.constant 0.000000e+00 : f32
      %43 = vector.broadcast %cst_31 : f32 to vector<16x32xf32>
      %c0_32 = arith.constant 0 : index
      %c0_33 = arith.constant 0 : index
      %44 = vector.load %arg14[%c0_32, %c0_33] : memref<16x32xf32, #tpu.memory_space<vmem>>, vector<16x32xf32>
      tpu.vector_store %arg14[%c0_32, %c0_33], %43 {strides = array<i32>} : memref<16x32xf32, #tpu.memory_space<vmem>>, vector<16x32xf32>,
    } else {
    }
    %c0 = arith.constant 0 : index
    %c0_1 = arith.constant 0 : index
    %3 = vector.load %arg2[%c0, %c0_1] : memref<16x32xf32, #tpu.memory_space<vmem>>, vector<16x32xf32>
    %c0_2 = arith.constant 0 : index
    %c0_3 = arith.constant 0 : index
    %c0_4 = arith.constant 0 : index
    %4 = vector.load %arg3[%c0_2, %c0_3, %c0_4] : memref<1x32x16xf32, #tpu.memory_space<vmem>>, vector<1x32x16xf32>
    %5 = vector.shape_cast %4 : vector<1x32x16xf32> to vector<32x16xf32>
    %cst = arith.constant dense<0.000000e+00> : vector<16x16xf32>
    %6 = tpu.matmul %3, %5, %cst {dimension_numbers = #tpu.dot_dimension_numbers<[1], [0], [0], [1], [0, 0, 1, 1], [], []>} : vector<16x32xf32>, vector<32x16xf32>, vector<16x16xf32> -> vector<16x16xf32>
    %c0_5 = arith.constant 0 : index
    %c0_6 = arith.constant 0 : index
    %c0_7 = arith.constant 0 : index
    %7 = vector.load %arg4[%c0_5, %c0_6, %c0_7] : memref<1x32x16xf32, #tpu.memory_space<vmem>>, vector<1x32x16xf32>
    %8 = vector.shape_cast %7 : vector<1x32x16xf32> to vector<32x16xf32>
    %cst_8 = arith.constant dense<0.000000e+00> : vector<16x16xf32>
    %9 = tpu.matmul %3, %8, %cst_8 {dimension_numbers = #tpu.dot_dimension_numbers<[1], [0], [0], [1], [0, 0, 1, 1], [], []>} : vector<16x32xf32>, vector<32x16xf32>, vector<16x16xf32> -> vector<16x16xf32>
    %c0_9 = arith.constant 0 : index
    %c0_10 = arith.constant 0 : index
    %c0_11 = arith.constant 0 : index
    %10 = vector.load %arg5[%c0_9, %c0_10, %c0_11] : memref<1x32x16xf32, #tpu.memory_space<vmem>>, vector<1x32x16xf32>
    %11 = vector.shape_cast %10 : vector<1x32x16xf32> to vector<32x16xf32>
    %cst_12 = arith.constant dense<0.000000e+00> : vector<16x16xf32>
    %12 = tpu.matmul %3, %11, %cst_12 {dimension_numbers = #tpu.dot_dimension_numbers<[1], [0], [0], [1], [0, 0, 1, 1], [], []>} : vector<16x32xf32>, vector<32x16xf32>, vector<16x16xf32> -> vector<16x16xf32>
    %cst_13 = arith.constant dense<0.000000e+00> : vector<16x16xf32>
    %13 = tpu.matmul %6, %9, %cst_13 {dimension_numbers = #tpu.dot_dimension_numbers<[1], [1], [0], [0], [0, 0, 1, 0], [], []>} : vector<16x16xf32>, vector<16x16xf32>, vector<16x16xf32> -> vector<16x16xf32>
    %cst_14 = arith.constant 2.500000e-01 : f32
    %14 = vector.broadcast %cst_14 : f32 to vector<16x16xf32>
    %15 = arith.mulf %13, %14 : vector<16x16xf32>
    %16 = tpu.iota {dimensions = array<i32: 0>} : vector<16x16xi32>
    %17 = tpu.iota {dimensions = array<i32: 1>} : vector<16x16xi32>
    %18 = arith.cmpi sle, %17, %16 : vector<16x16xi32>
    %cst_15 = arith.constant 0xFF800000 : f32
    %19 = vector.broadcast %cst_15 : f32 to vector<16x16xf32>
    %20 = arith.select %18, %15, %19 : vector<16x16xi1>, vector<16x16xf32>
    %cst_16 = arith.constant dense<0xFF800000> : vector<16xf32>
    %21 = vector.multi_reduction <maximumf>, %20, %cst_16 [1] : vector<16x16xf32> to vector<16xf32>
    %22 = vector.shape_cast %21 : vector<16xf32> to vector<16x1xf32>
    %23 = vector.broadcast %22 : vector<16x1xf32> to vector<16x16xf32>
    %24 = arith.subf %20, %23 : vector<16x16xf32>
    %25 = math.exp %24 : vector<16x16xf32>
    %cst_17 = arith.constant dense<0.000000e+00> : vector<16xf32>
    %26 = vector.multi_reduction <add>, %25, %cst_17 [1] : vector<16x16xf32> to vector<16xf32>
    %27 = vector.shape_cast %26 : vector<16xf32> to vector<16x1xf32>
    %28 = vector.broadcast %27 : vector<16x1xf32> to vector<16x16xf32>
    %29 = arith.divf %25, %28 : vector<16x16xf32>
    %c0_18 = arith.constant 0 : index
    %c0_19 = arith.constant 0 : index
    %c0_20 = arith.constant 0 : index
    %30 = vector.load %arg12[%c0_18, %c0_19, %c0_20] : memref<1x16x16xf32, #tpu.memory_space<vmem>>, vector<1x16x16xf32>
    %31 = vector.shape_cast %30 : vector<1x16x16xf32> to vector<16x16xf32>
    %32 = vector.shape_cast %29 : vector<16x16xf32> to vector<1x16x16xf32>
    tpu.vector_store %arg12[%c0_18, %c0_19, %c0_20], %32 {strides = array<i32>} : memref<1x16x16xf32, #tpu.memory_space<vmem>>, vector<1x16x16xf32>,
    %cst_21 = arith.constant dense<0.000000e+00> : vector<16x16xf32>
    %33 = tpu.matmul %29, %12, %cst_21 {dimension_numbers = #tpu.dot_dimension_numbers<[1], [0], [0], [1], [0, 0, 1, 1], [], []>} : vector<16x16xf32>, vector<16x16xf32>, vector<16x16xf32> -> vector<16x16xf32>
    %c0_22 = arith.constant 0 : index
    %c0_23 = arith.constant 0 : index
    %34 = vector.load %arg14[%c0_22, %c0_23] : memref<16x32xf32, #tpu.memory_space<vmem>>, vector<16x32xf32>
    %c0_24 = arith.constant 0 : index
    %c0_25 = arith.constant 0 : index
    %c0_26 = arith.constant 0 : index
    %35 = vector.load %arg6[%c0_24, %c0_25, %c0_26] : memref<1x16x32xf32, #tpu.memory_space<vmem>>, vector<1x16x32xf32>
    %36 = vector.shape_cast %35 : vector<1x16x32xf32> to vector<16x32xf32>
    %cst_27 = arith.constant dense<0.000000e+00> : vector<16x32xf32>
    %37 = tpu.matmul %33, %36, %cst_27 {dimension_numbers = #tpu.dot_dimension_numbers<[1], [0], [0], [1], [0, 0, 1, 1], [], []>} : vector<16x16xf32>, vector<16x32xf32>, vector<16x32xf32> -> vector<16x32xf32>
    %38 = arith.addf %34, %37 : vector<16x32xf32>
    %c0_28 = arith.constant 0 : index
    %c0_29 = arith.constant 0 : index
    %39 = vector.load %arg14[%c0_28, %c0_29] : memref<16x32xf32, #tpu.memory_space<vmem>>, vector<16x32xf32>
    tpu.vector_store %arg14[%c0_28, %c0_29], %38 {strides = array<i32>} : memref<16x32xf32, #tpu.memory_space<vmem>>, vector<16x32xf32>,
    %c1_i32 = arith.constant 1 : i32
    %40 = arith.cmpi eq, %arg0, %c1_i32 : i32
    %41 = arith.extui %40 : i1 to i32
    %c0_i32_30 = arith.constant 0 : i32
    %42 = arith.cmpi ne, %41, %c0_i32_30 : i32
    scf.if %42 {
      %c0_31 = arith.constant 0 : index
      %c0_32 = arith.constant 0 : index
      %43 = vector.load %arg14[%c0_31, %c0_32] : memref<16x32xf32, #tpu.memory_space<vmem>>, vector<16x32xf32>
      %44 = arith.addf %3, %43 : vector<16x32xf32>
      %c0_33 = arith.constant 0 : index
      %c0_34 = arith.constant 0 : index
      %45 = vector.load %arg7[%c0_33, %c0_34] : memref<1x32xf32, #tpu.memory_space<vmem>>, vector<1x32xf32>
      %46 = vector.broadcast %45 : vector<1x32xf32> to vector<16x32xf32>
      %47 = arith.addf %44, %46 : vector<16x32xf32>
      %c0_35 = arith.constant 0 : index
      %c0_36 = arith.constant 0 : index
      %48 = vector.load %arg8[%c0_35, %c0_36] : memref<32x64xf32, #tpu.memory_space<vmem>>, vector<32x64xf32>
      %cst_37 = arith.constant dense<0.000000e+00> : vector<16x64xf32>
      %49 = tpu.matmul %47, %48, %cst_37 {dimension_numbers = #tpu.dot_dimension_numbers<[1], [0], [0], [1], [0, 0, 1, 1], [], []>} : vector<16x32xf32>, vector<32x64xf32>, vector<16x64xf32> -> vector<16x64xf32>
      %c0_38 = arith.constant 0 : index
      %c0_39 = arith.constant 0 : index
      %50 = vector.load %arg9[%c0_38, %c0_39] : memref<1x64xf32, #tpu.memory_space<vmem>>, vector<1x64xf32>
      %51 = vector.broadcast %50 : vector<1x64xf32> to vector<16x64xf32>
      %52 = arith.addf %49, %51 : vector<16x64xf32>
      %cst_40 = arith.constant 0.000000e+00 : f32
      %53 = vector.broadcast %cst_40 : f32 to vector<16x64xf32>
      %54 = arith.maximumf %52, %53 : vector<16x64xf32>
      %c0_41 = arith.constant 0 : index
      %c0_42 = arith.constant 0 : index
      %55 = vector.load %arg10[%c0_41, %c0_42] : memref<64x32xf32, #tpu.memory_space<vmem>>, vector<64x32xf32>
      %cst_43 = arith.constant dense<0.000000e+00> : vector<16x32xf32>
      %56 = tpu.matmul %54, %55, %cst_43 {dimension_numbers = #tpu.dot_dimension_numbers<[1], [0], [0], [1], [0, 0, 1, 1], [], []>} : vector<16x64xf32>, vector<64x32xf32>, vector<16x32xf32> -> vector<16x32xf32>
      %57 = arith.addf %47, %56 : vector<16x32xf32>
      %c0_44 = arith.constant 0 : index
      %c0_45 = arith.constant 0 : index
      %58 = vector.load %arg11[%c0_44, %c0_45] : memref<1x32xf32, #tpu.memory_space<vmem>>, vector<1x32xf32>
      %59 = vector.broadcast %58 : vector<1x32xf32> to vector<16x32xf32>
      %60 = arith.addf %57, %59 : vector<16x32xf32>
      %c0_46 = arith.constant 0 : index
      %c0_47 = arith.constant 0 : index
      %61 = vector.load %arg13[%c0_46, %c0_47] : memref<16x32xf32, #tpu.memory_space<vmem>>, vector<16x32xf32>
      tpu.vector_store %arg13[%c0_46, %c0_47], %60 {strides = array<i32>} : memref<16x32xf32, #tpu.memory_space<vmem>>, vector<16x32xf32>,
    } else {
    }
    return
  }
  func.func @transform_0(%arg0: i32) -> i32 {
    %c0_i32 = arith.constant 0 : i32
    %c0_i32_0 = arith.constant 0 : i32
    return %c0_i32 : i32
  }
  func.func @transform_1(%arg0: i32) -> (i32, i32) {
    %c0_i32 = arith.constant 0 : i32
    %c0_i32_0 = arith.constant 0 : i32
    %c0_i32_1 = arith.constant 0 : i32
    return %c0_i32, %c0_i32_0 : i32, i32
  }
  func.func @transform_2(%arg0: i32) -> (i32, i32, i32) {
    %c0_i32 = arith.constant 0 : i32
    %c0_i32_0 = arith.constant 0 : i32
    %c0_i32_1 = arith.constant 0 : i32
    return %arg0, %c0_i32, %c0_i32_0 : i32, i32, i32
  }
  func.func @transform_3(%arg0: i32) -> (i32, i32, i32) {
    %c0_i32 = arith.constant 0 : i32
    %c0_i32_0 = arith.constant 0 : i32
    %c0_i32_1 = arith.constant 0 : i32
    return %arg0, %c0_i32, %c0_i32_0 : i32, i32, i32
  }
  func.func @transform_4(%arg0: i32) -> (i32, i32, i32) {
    %c0_i32 = arith.constant 0 : i32
    %c0_i32_0 = arith.constant 0 : i32
    %c0_i32_1 = arith.constant 0 : i32
    return %arg0, %c0_i32, %c0_i32_0 : i32, i32, i32
  }
  func.func @transform_5(%arg0: i32) -> (i32, i32, i32) {
    %c0_i32 = arith.constant 0 : i32
    %c0_i32_0 = arith.constant 0 : i32
    %c0_i32_1 = arith.constant 0 : i32
    return %arg0, %c0_i32, %c0_i32_0 : i32, i32, i32
  }
  func.func @transform_6(%arg0: i32) -> (i32, i32) {
    %c0_i32 = arith.constant 0 : i32
    %c0_i32_0 = arith.constant 0 : i32
    %c0_i32_1 = arith.constant 0 : i32
    return %c0_i32, %c0_i32_0 : i32, i32
  }
  func.func @transform_7(%arg0: i32) -> (i32, i32) {
    %c0_i32 = arith.constant 0 : i32
    %c0_i32_0 = arith.constant 0 : i32
    %c0_i32_1 = arith.constant 0 : i32
    return %c0_i32, %c0_i32_0 : i32, i32
  }
  func.func @transform_8(%arg0: i32) -> (i32, i32) {
    %c0_i32 = arith.constant 0 : i32
    %c0_i32_0 = arith.constant 0 : i32
    %c0_i32_1 = arith.constant 0 : i32
    return %c0_i32, %c0_i32_0 : i32, i32
  }
  func.func @transform_9(%arg0: i32) -> (i32, i32) {
    %c0_i32 = arith.constant 0 : i32
    %c0_i32_0 = arith.constant 0 : i32
    %c0_i32_1 = arith.constant 0 : i32
    return %c0_i32, %c0_i32_0 : i32, i32
  }
  func.func @transform_10(%arg0: i32) -> (i32, i32) {
    %c0_i32 = arith.constant 0 : i32
    %c0_i32_0 = arith.constant 0 : i32
    %c0_i32_1 = arith.constant 0 : i32
    return %c0_i32, %c0_i32_0 : i32, i32
  }
  func.func @transform_11(%arg0: i32) -> (i32, i32, i32) {
    %c0_i32 = arith.constant 0 : i32
    %c0_i32_0 = arith.constant 0 : i32
    %c0_i32_1 = arith.constant 0 : i32
    return %arg0, %c0_i32, %c0_i32_0 : i32, i32, i32
  }
  func.func @transform_12(%arg0: i32) -> (i32, i32) {
    %c0_i32 = arith.constant 0 : i32
    %c0_i32_0 = arith.constant 0 : i32
    %c0_i32_1 = arith.constant 0 : i32
    return %c0_i32, %c0_i32_0 : i32, i32
  }
}

</mosaic_0001>

<llo_original>
// kernel: tpu_custom_call.1
$region0: #{tpu_custom_call.1}
  #allocation0 [shape = 'u32[]', space=smem, size = 0x4, offset = 0x4, fixed_abs, tag = 'smem constant byte address 0x4 - core index']
  #allocation1 [shape = 'u32[144,128]{1,0:T(1,128)}', space=vmem, size = 0x12000, scoped, tag = 'internal scratch']
  #allocation2 [shape = 'f32[16,32]{1,0:T(8,128)}', space=vmem, size = 0x2000, scoped, tag = 'scratch operand']
  %s0 = inlined_call_operand.vmem [shape: f32[2], index: 0, kind: input, shape index: {}]
  %s1 = inlined_call_operand.vmem [shape: f32[16,32], index: 1, kind: input, shape index: {}]
  %s2 = inlined_call_operand.vmem [shape: f32[2,32,16], index: 2, kind: input, shape index: {}]
  %s3 = inlined_call_operand.vmem [shape: f32[2,32,16], index: 3, kind: input, shape index: {}]
  %s4 = inlined_call_operand.vmem [shape: f32[2,32,16], index: 4, kind: input, shape index: {}]
  %s5 = inlined_call_operand.vmem [shape: f32[2,16,32], index: 5, kind: input, shape index: {}]
  %s6 = inlined_call_operand.vmem [shape: f32[1,32], index: 6, kind: input, shape index: {}]
  %s7 = inlined_call_operand.vmem [shape: f32[32,64], index: 7, kind: input, shape index: {}]
  %s8 = inlined_call_operand.vmem [shape: f32[1,64], index: 8, kind: input, shape index: {}]
  %s9 = inlined_call_operand.vmem [shape: f32[64,32], index: 9, kind: input, shape index: {}]
  %s10 = inlined_call_operand.vmem [shape: f32[1,32], index: 10, kind: input, shape index: {}]
  %s11 = inlined_call_operand.hbm [shape: f32[2,16,16], index: 11, kind: output, shape index: {0}]
  %s12 = inlined_call_operand.hbm [shape: f32[16,32], index: 12, kind: output, shape index: {1}]
  %13 = xla_tuple %s11, %s12
  %s14 = sld [smem:[#allocation0]]
  $region97: #{tpu_custom_call.1} parent=0
    _
  %s16 = ssub.s32 1, %s14
  %s17 = scalar_select 0, %s16, %s14
  $region1: #{tpu_custom_call.1} parent=0
    #allocation3 [shape = 'u8[512]{0}', space=smem, size = 0x200, scoped, tag = 'input window, operand 0, single buffered']
    #allocation4 [shape = 's32[2]{0}', space=sflag, size = 0x8, scoped, tag = 'scoped memory for tpu_custom_call.1']
    #allocation5 [shape = 's32[2]{0}', space=sflag, size = 0x8, scoped, tag = 'scoped memory for tpu_custom_call.1']
    #allocation6 [shape = 'u8[16384]{0}', space=vmem, size = 0x4000, scoped, tag = 'output window, operand 0']
    #allocation7 [shape = 'u8[8192]{0}', space=vmem, size = 0x2000, scoped, tag = 'output window, operand 1, single buffered']
    #allocation8 [shape = 's32[1]{0}', space=sflag, size = 0x4, scoped, tag = 'scoped memory for tpu_custom_call.1']
    %18 = vsyncpa [#allocation5], 0
    %19 = vsyncpa [#allocation4], 0
    %s20 = scalar_lea.sflag [#allocation4], 1
    %21 = vsyncpa %s20, 0
    %22 = vsyncpa [#allocation8], 0
    loop: start=0, step=1, limit=4
    $region2: #{tpu_custom_call.1} parent=1 // loop_pre_header
      _
    $region3: #{tpu_custom_call.1} parent=1 // loop_header
      %s24 = sphi 0, %s28
      %p25 = scmp.ge.s32.totalorder %s24, 4
      %s32 = sphi 0, %s32
      %s34 = sphi 0, %s32
      %s35 = sphi 0, %s34
      %s49 = sphi 0, %s35
      %s53 = sphi 0, %s53
      %s55 = sphi 0, %s53
      %s56 = sphi 0, %s55
      %s70 = sphi 0, %s56
      %s76 = sphi 0, %s78
      %s79 = sphi 0, %s76
      %s80 = sphi 0, %s79
      %s96 = sphi 0, %s80
      %s102 = sphi 0, %s104
      %s105 = sphi 0, %s102
      %s106 = sphi 0, %s105
      %s122 = sphi 0, %s106
      %s128 = sphi 0, %s130
      %s131 = sphi 0, %s128
      %s132 = sphi 0, %s131
      %s148 = sphi 0, %s132
      %s154 = sphi 0, %s156
      %s157 = sphi 0, %s154
      %s158 = sphi 0, %s157
      %s174 = sphi 0, %s158
      %s178 = sphi 0, %s178
      %s180 = sphi 0, %s178
      %s181 = sphi 0, %s180
      %s195 = sphi 0, %s181
      %s199 = sphi 0, %s199
      %s201 = sphi 0, %s199
      %s202 = sphi 0, %s201
      %s216 = sphi 0, %s202
      %s220 = sphi 0, %s220
      %s222 = sphi 0, %s220
      %s223 = sphi 0, %s222
      %s237 = sphi 0, %s223
      %s241 = sphi 0, %s241
      %s243 = sphi 0, %s241
      %s244 = sphi 0, %s243
      %s258 = sphi 0, %s244
      %s262 = sphi 0, %s262
      %s264 = sphi 0, %s262
      %s265 = sphi 0, %s264
      %s279 = sphi 0, %s265
      %s285 = sphi 0, %s287
      %s288 = sphi 0, %s285
      %s289 = sphi 0, %s288
      %s305 = sphi 0, %s289
      %s309 = sphi 0, %s309
      %s311 = sphi 0, %s309
      %s312 = sphi 0, %s311
      %s326 = sphi 0, %s312
    $region4: #{tpu_custom_call.1} parent=1 // loop_header_branch
      %27 = sbr.rel (%p25) target = $region8
    $region5: #{tpu_custom_call.1} parent=1 // loop_body
      %s29 = ssub.s32 %s24, 1
      %s30 = ssub.s32 %s24, 2
      %s31 = sadd.s32 %s24, 1
      %s33 = sadd.s32 %s32, 1
      %p36 = scmp.eq.s32.totalorder %s24, 1
      %p37 = scmp.ne.s32.totalorder %s32, %s34
      %p38 = scmp.eq.s32.totalorder %s24, 0
      %p39 = por %p37, %p38
      %p40 = scmp.ne.s32.totalorder %s32, %s34
      %p41 = scmp.eq.s32.totalorder %s29, 1
      %p42 = por %p40, %p41
      %p43 = scmp.ne.s32.totalorder %s34, %s35
      %p44 = scmp.eq.s32.totalorder %s29, 0
      %p45 = por %p43, %p44
      %p46 = scmp.ne.s32.totalorder %s34, %s35
      %p47 = scmp.eq.s32.totalorder %s30, 1
      %p48 = por %p46, %p47
      %p50 = scmp.ne.s32.totalorder %s35, %s49
      %p51 = scmp.eq.s32.totalorder %s30, 0
      %p52 = por %p50, %p51
      %s54 = sadd.s32 %s53, 1
      %p57 = scmp.eq.s32.totalorder %s24, 1
      %p58 = scmp.ne.s32.totalorder %s53, %s55
      %p59 = scmp.eq.s32.totalorder %s24, 0
      %p60 = por %p58, %p59
      %p61 = scmp.ne.s32.totalorder %s53, %s55
      %p62 = scmp.eq.s32.totalorder %s29, 1
      %p63 = por %p61, %p62
      %p64 = scmp.ne.s32.totalorder %s55, %s56
      %p65 = scmp.eq.s32.totalorder %s29, 0
      %p66 = por %p64, %p65
      %p67 = scmp.ne.s32.totalorder %s55, %s56
      %p68 = scmp.eq.s32.totalorder %s30, 1
      %p69 = por %p67, %p68
      %p71 = scmp.ne.s32.totalorder %s56, %s70
      %p72 = scmp.eq.s32.totalorder %s30, 0
      %p73 = por %p71, %p72
      %s74 = ssub.s32 %s24, %s31
      %p75 = scmp.eq.s32.totalorder %s74, 0
      %s77 = sadd.s32 %s76, 1
      %s78 = scalar_select %p75, %s76, %s77
      %p81 = pneg %p75
      %p82 = scmp.eq.s32.totalorder %s24, 1
      %p83 = por %p81, %p82
      %p84 = scmp.ne.s32.totalorder %s76, %s79
      %p85 = scmp.eq.s32.totalorder %s24, 0
      %p86 = por %p84, %p85
      %p87 = scmp.ne.s32.totalorder %s76, %s79
      %p88 = scmp.eq.s32.totalorder %s29, 1
      %p89 = por %p87, %p88
      %p90 = scmp.ne.s32.totalorder %s79, %s80
      %p91 = scmp.eq.s32.totalorder %s29, 0
      %p92 = por %p90, %p91
      %p93 = scmp.ne.s32.totalorder %s79, %s80
      %p94 = scmp.eq.s32.totalorder %s30, 1
      %p95 = por %p93, %p94
      %p97 = scmp.ne.s32.totalorder %s80, %s96
      %p98 = scmp.eq.s32.totalorder %s30, 0
      %p99 = por %p97, %p98
      %s100 = ssub.s32 %s24, %s31
      %p101 = scmp.eq.s32.totalorder %s100, 0
      %s103 = sadd.s32 %s102, 1
      %s104 = scalar_select %p101, %s102, %s103
      %p107 = pneg %p101
      %p108 = scmp.eq.s32.totalorder %s24, 1
      %p109 = por %p107, %p108
      %p110 = scmp.ne.s32.totalorder %s102, %s105
      %p111 = scmp.eq.s32.totalorder %s24, 0
      %p112 = por %p110, %p111
      %p113 = scmp.ne.s32.totalorder %s102, %s105
      %p114 = scmp.eq.s32.totalorder %s29, 1
      %p115 = por %p113, %p114
      %p116 = scmp.ne.s32.totalorder %s105, %s106
      %p117 = scmp.eq.s32.totalorder %s29, 0
      %p118 = por %p116, %p117
      %p119 = scmp.ne.s32.totalorder %s105, %s106
      %p120 = scmp.eq.s32.totalorder %s30, 1
      %p121 = por %p119, %p120
      %p123 = scmp.ne.s32.totalorder %s106, %s122
      %p124 = scmp.eq.s32.totalorder %s30, 0
      %p125 = por %p123, %p124
      %s126 = ssub.s32 %s24, %s31
      %p127 = scmp.eq.s32.totalorder %s126, 0
      %s129 = sadd.s32 %s128, 1
      %s130 = scalar_select %p127, %s128, %s129
      %p133 = pneg %p127
      %p134 = scmp.eq.s32.totalorder %s24, 1
      %p135 = por %p133, %p134
      %p136 = scmp.ne.s32.totalorder %s128, %s131
      %p137 = scmp.eq.s32.totalorder %s24, 0
      %p138 = por %p136, %p137
      %p139 = scmp.ne.s32.totalorder %s128, %s131
      %p140 = scmp.eq.s32.totalorder %s29, 1
      %p141 = por %p139, %p140
      %p142 = scmp.ne.s32.totalorder %s131, %s132
      %p143 = scmp.eq.s32.totalorder %s29, 0
      %p144 = por %p142, %p143
      %p145 = scmp.ne.s32.totalorder %s131, %s132
      %p146 = scmp.eq.s32.totalorder %s30, 1
      %p147 = por %p145, %p146
      %p149 = scmp.ne.s32.totalorder %s132, %s148
      %p150 = scmp.eq.s32.totalorder %s30, 0
      %p151 = por %p149, %p150
      %s152 = ssub.s32 %s24, %s31
      %p153 = scmp.eq.s32.totalorder %s152, 0
      %s155 = sadd.s32 %s154, 1
      %s156 = scalar_select %p153, %s154, %s155
      %p159 = pneg %p153
      %p160 = scmp.eq.s32.totalorder %s24, 1
      %p161 = por %p159, %p160
      %p162 = scmp.ne.s32.totalorder %s154, %s157
      %p163 = scmp.eq.s32.totalorder %s24, 0
      %p164 = por %p162, %p163
      %p165 = scmp.ne.s32.totalorder %s154, %s157
      %p166 = scmp.eq.s32.totalorder %s29, 1
      %p167 = por %p165, %p166
      %p168 = scmp.ne.s32.totalorder %s157, %s158
      %p169 = scmp.eq.s32.totalorder %s29, 0
      %p170 = por %p168, %p169
      %p171 = scmp.ne.s32.totalorder %s157, %s158
      %p172 = scmp.eq.s32.totalorder %s30, 1
      %p173 = por %p171, %p172
      %p175 = scmp.ne.s32.totalorder %s158, %s174
      %p176 = scmp.eq.s32.totalorder %s30, 0
      %p177 = por %p175, %p176
      %s179 = sadd.s32 %s178, 1
      %p182 = scmp.eq.s32.totalorder %s24, 1
      %p183 = scmp.ne.s32.totalorder %s178, %s180
      %p184 = scmp.eq.s32.totalorder %s24, 0
      %p185 = por %p183, %p184
      %p186 = scmp.ne.s32.totalorder %s178, %s180
      %p187 = scmp.eq.s32.totalorder %s29, 1
      %p188 = por %p186, %p187
      %p189 = scmp.ne.s32.totalorder %s180, %s181
      %p190 = scmp.eq.s32.totalorder %s29, 0
      %p191 = por %p189, %p190
      %p192 = scmp.ne.s32.totalorder %s180, %s181
      %p193 = scmp.eq.s32.totalorder %s30, 1
      %p194 = por %p192, %p193
      %p196 = scmp.ne.s32.totalorder %s181, %s195
      %p197 = scmp.eq.s32.totalorder %s30, 0
      %p198 = por %p196, %p197
      %s200 = sadd.s32 %s199, 1
      %p203 = scmp.eq.s32.totalorder %s24, 1
      %p204 = scmp.ne.s32.totalorder %s199, %s201
      %p205 = scmp.eq.s32.totalorder %s24, 0
      %p206 = por %p204, %p205
      %p207 = scmp.ne.s32.totalorder %s199, %s201
      %p208 = scmp.eq.s32.totalorder %s29, 1
      %p209 = por %p207, %p208
      %p210 = scmp.ne.s32.totalorder %s201, %s202
      %p211 = scmp.eq.s32.totalorder %s29, 0
      %p212 = por %p210, %p211
      %p213 = scmp.ne.s32.totalorder %s201, %s202
      %p214 = scmp.eq.s32.totalorder %s30, 1
      %p215 = por %p213, %p214
      %p217 = scmp.ne.s32.totalorder %s202, %s216
      %p218 = scmp.eq.s32.totalorder %s30, 0
      %p219 = por %p217, %p218
      %s221 = sadd.s32 %s220, 1
      %p224 = scmp.eq.s32.totalorder %s24, 1
      %p225 = scmp.ne.s32.totalorder %s220, %s222
      %p226 = scmp.eq.s32.totalorder %s24, 0
      %p227 = por %p225, %p226
      %p228 = scmp.ne.s32.totalorder %s220, %s222
      %p229 = scmp.eq.s32.totalorder %s29, 1
      %p230 = por %p228, %p229
      %p231 = scmp.ne.s32.totalorder %s222, %s223
      %p232 = scmp.eq.s32.totalorder %s29, 0
      %p233 = por %p231, %p232
      %p234 = scmp.ne.s32.totalorder %s222, %s223
      %p235 = scmp.eq.s32.totalorder %s30, 1
      %p236 = por %p234, %p235
      %p238 = scmp.ne.s32.totalorder %s223, %s237
      %p239 = scmp.eq.s32.totalorder %s30, 0
      %p240 = por %p238, %p239
      %s242 = sadd.s32 %s241, 1
      %p245 = scmp.eq.s32.totalorder %s24, 1
      %p246 = scmp.ne.s32.totalorder %s241, %s243
      %p247 = scmp.eq.s32.totalorder %s24, 0
      %p248 = por %p246, %p247
      %p249 = scmp.ne.s32.totalorder %s241, %s243
      %p250 = scmp.eq.s32.totalorder %s29, 1
      %p251 = por %p249, %p250
      %p252 = scmp.ne.s32.totalorder %s243, %s244
      %p253 = scmp.eq.s32.totalorder %s29, 0
      %p254 = por %p252, %p253
      %p255 = scmp.ne.s32.totalorder %s243, %s244
      %p256 = scmp.eq.s32.totalorder %s30, 1
      %p257 = por %p255, %p256
      %p259 = scmp.ne.s32.totalorder %s244, %s258
      %p260 = scmp.eq.s32.totalorder %s30, 0
      %p261 = por %p259, %p260
      %s263 = sadd.s32 %s262, 1
      %p266 = scmp.eq.s32.totalorder %s24, 1
      %p267 = scmp.ne.s32.totalorder %s262, %s264
      %p268 = scmp.eq.s32.totalorder %s24, 0
      %p269 = por %p267, %p268
      %p270 = scmp.ne.s32.totalorder %s262, %s264
      %p271 = scmp.eq.s32.totalorder %s29, 1
      %p272 = por %p270, %p271
      %p273 = scmp.ne.s32.totalorder %s264, %s265
      %p274 = scmp.eq.s32.totalorder %s29, 0
      %p275 = por %p273, %p274
      %p276 = scmp.ne.s32.totalorder %s264, %s265
      %p277 = scmp.eq.s32.totalorder %s30, 1
      %p278 = por %p276, %p277
      %p280 = scmp.ne.s32.totalorder %s265, %s279
      %p281 = scmp.eq.s32.totalorder %s30, 0
      %p282 = por %p280, %p281
      %s283 = ssub.s32 %s24, %s31
      %p284 = scmp.eq.s32.totalorder %s283, 0
      %s286 = sadd.s32 %s285, 1
      %s287 = scalar_select %p284, %s285, %s286
      %p290 = pneg %p284
      %p291 = scmp.eq.s32.totalorder %s24, 1
      %p292 = por %p290, %p291
      %p293 = scmp.ne.s32.totalorder %s285, %s288
      %p294 = scmp.eq.s32.totalorder %s24, 0
      %p295 = por %p293, %p294
      %p296 = scmp.ne.s32.totalorder %s285, %s288
      %p297 = scmp.eq.s32.totalorder %s29, 1
      %p298 = por %p296, %p297
      %p299 = scmp.ne.s32.totalorder %s288, %s289
      %p300 = scmp.eq.s32.totalorder %s29, 0
      %p301 = por %p299, %p300
      %p302 = scmp.ne.s32.totalorder %s288, %s289
      %p303 = scmp.eq.s32.totalorder %s30, 1
      %p304 = por %p302, %p303
      %p306 = scmp.ne.s32.totalorder %s289, %s305
      %p307 = scmp.eq.s32.totalorder %s30, 0
      %p308 = por %p306, %p307
      %s310 = sadd.s32 %s309, 1
      %p313 = scmp.eq.s32.totalorder %s24, 1
      %p314 = scmp.ne.s32.totalorder %s309, %s311
      %p315 = scmp.eq.s32.totalorder %s24, 0
      %p316 = por %p314, %p315
      %p317 = scmp.ne.s32.totalorder %s309, %s311
      %p318 = scmp.eq.s32.totalorder %s29, 1
      %p319 = por %p317, %p318
      %p320 = scmp.ne.s32.totalorder %s311, %s312
      %p321 = scmp.eq.s32.totalorder %s29, 0
      %p322 = por %p320, %p321
      %p323 = scmp.ne.s32.totalorder %s311, %s312
      %p324 = scmp.eq.s32.totalorder %s30, 1
      %p325 = por %p323, %p324
      %p327 = scmp.ne.s32.totalorder %s312, %s326
      %p328 = scmp.eq.s32.totalorder %s30, 0
      %p329 = por %p327, %p328
      %p330 = scmp.le.s32.totalorder 1, %s24
      %p331 = scmp.lt.s32.totalorder %s24, 3
      %p332 = pnand %p330, %p331
      %p333 = pneg %p332
      // Predicated region
      $region9: #{tpu_custom_call.1} parent=5 // pred_check
        _
      $region10: #{tpu_custom_call.1} parent=5 // pred_check_branch
        %335 = sbr.rel (%p332) target = $region12
      $region11: #{tpu_custom_call.1} parent=5 // pred_region
        %s336 = ssub.s32 %s24, 1
        // Predicated region
        $region13: #{tpu_custom_call.1} parent=11 // pred_check
          %p337 = pneg %p45
        $region14: #{tpu_custom_call.1} parent=11 // pred_check_branch
          %339 = sbr.rel (%p337) target = $region16
        $region15: #{tpu_custom_call.1} parent=11 // pred_region
          %s341 = ssub.s32 16, 16
          %342 = vsyncadd [#allocation5], %s341
          %s344 = sshll.u32 %s0, 4
          %s345 = int_to_ptr.vmem [resolvable:$true] %s344
          %347 = dma.vmem_to_smem %s345, 16, [#allocation3], [#allocation5]
        $region16: #{tpu_custom_call.1} parent=11 // pred_fallthru
          _
        // Predicated region
        $region17: #{tpu_custom_call.1} parent=11 // pred_check
          %p348 = pneg %p66
        $region18: #{tpu_custom_call.1} parent=11 // pred_check_branch
          %350 = sbr.rel (%p348) target = $region20
        $region19: #{tpu_custom_call.1} parent=11 // pred_region
          _
        $region20: #{tpu_custom_call.1} parent=11 // pred_fallthru
          _
        // Predicated region
        $region21: #{tpu_custom_call.1} parent=11 // pred_check
          %p351 = pneg %p191
        $region22: #{tpu_custom_call.1} parent=11 // pred_check_branch
          %353 = sbr.rel (%p351) target = $region24
        $region23: #{tpu_custom_call.1} parent=11 // pred_region
          _
        $region24: #{tpu_custom_call.1} parent=11 // pred_fallthru
          _
        // Predicated region
        $region25: #{tpu_custom_call.1} parent=11 // pred_check
          %p354 = pneg %p212
        $region26: #{tpu_custom_call.1} parent=11 // pred_check_branch
          %356 = sbr.rel (%p354) target = $region28
        $region27: #{tpu_custom_call.1} parent=11 // pred_region
          _
        $region28: #{tpu_custom_call.1} parent=11 // pred_fallthru
          _
        // Predicated region
        $region29: #{tpu_custom_call.1} parent=11 // pred_check
          %p357 = pneg %p233
        $region30: #{tpu_custom_call.1} parent=11 // pred_check_branch
          %359 = sbr.rel (%p357) target = $region32
        $region31: #{tpu_custom_call.1} parent=11 // pred_region
          _
        $region32: #{tpu_custom_call.1} parent=11 // pred_fallthru
          _
        // Predicated region
        $region33: #{tpu_custom_call.1} parent=11 // pred_check
          %p360 = pneg %p254
        $region34: #{tpu_custom_call.1} parent=11 // pred_check_branch
          %362 = sbr.rel (%p360) target = $region36
        $region35: #{tpu_custom_call.1} parent=11 // pred_region
          _
        $region36: #{tpu_custom_call.1} parent=11 // pred_fallthru
          _
        // Predicated region
        $region37: #{tpu_custom_call.1} parent=11 // pred_check
          %p363 = pneg %p275
        $region38: #{tpu_custom_call.1} parent=11 // pred_check_branch
          %365 = sbr.rel (%p363) target = $region40
        $region39: #{tpu_custom_call.1} parent=11 // pred_region
          _
        $region40: #{tpu_custom_call.1} parent=11 // pred_fallthru
          _
      $region12: #{tpu_custom_call.1} parent=5 // pred_fallthru
        _
      %p366 = scmp.lt.s32.totalorder %s24, 2
      // Predicated region
      $region41: #{tpu_custom_call.1} parent=5 // pred_check
        %p367 = pneg %p366
      $region42: #{tpu_custom_call.1} parent=5 // pred_check_branch
        %369 = sbr.rel (%p367) target = $region44
      $region43: #{tpu_custom_call.1} parent=5 // pred_region
        // Predicated region
        $region45: #{tpu_custom_call.1} parent=43 // pred_check
          %p370 = pneg %p86
        $region46: #{tpu_custom_call.1} parent=43 // pred_check_branch
          %372 = sbr.rel (%p370) target = $region48
        $region47: #{tpu_custom_call.1} parent=43 // pred_region
          %p373 = scmp.lt.s32.totalorder %s24, 1
          %s374 = scalar_select %p373, %s24, 1
          %s375 = smul.addr %s374, 4
          %s376 = smul.addr %s375, 8
          %s377 = scalar_lea.vmem %s2, %s376
        $region48: #{tpu_custom_call.1} parent=43 // pred_fallthru
          _
        // Predicated region
        $region49: #{tpu_custom_call.1} parent=43 // pred_check
          %p378 = pneg %p112
        $region50: #{tpu_custom_call.1} parent=43 // pred_check_branch
          %380 = sbr.rel (%p378) target = $region52
        $region51: #{tpu_custom_call.1} parent=43 // pred_region
          %p381 = scmp.lt.s32.totalorder %s24, 1
          %s382 = scalar_select %p381, %s24, 1
          %s383 = smul.addr %s382, 4
          %s384 = smul.addr %s383, 8
          %s385 = scalar_lea.vmem %s3, %s384
        $region52: #{tpu_custom_call.1} parent=43 // pred_fallthru
          _
        // Predicated region
        $region53: #{tpu_custom_call.1} parent=43 // pred_check
          %p386 = pneg %p138
        $region54: #{tpu_custom_call.1} parent=43 // pred_check_branch
          %388 = sbr.rel (%p386) target = $region56
        $region55: #{tpu_custom_call.1} parent=43 // pred_region
          %p389 = scmp.lt.s32.totalorder %s24, 1
          %s390 = scalar_select %p389, %s24, 1
          %s391 = smul.addr %s390, 4
          %s392 = smul.addr %s391, 8
          %s393 = scalar_lea.vmem %s4, %s392
        $region56: #{tpu_custom_call.1} parent=43 // pred_fallthru
          _
        // Predicated region
        $region57: #{tpu_custom_call.1} parent=43 // pred_check
          %p394 = pneg %p164
        $region58: #{tpu_custom_call.1} parent=43 // pred_check_branch
          %396 = sbr.rel (%p394) target = $region60
        $region59: #{tpu_custom_call.1} parent=43 // pred_region
          %p397 = scmp.lt.s32.totalorder %s24, 1
          %s398 = scalar_select %p397, %s24, 1
          %s399 = smul.addr %s398, 2
          %s400 = smul.addr %s399, 8
          %s401 = scalar_lea.vmem %s5, %s400
        $region60: #{tpu_custom_call.1} parent=43 // pred_fallthru
          _
      $region44: #{tpu_custom_call.1} parent=5 // pred_fallthru
        _
      %p402 = scmp.le.s32.totalorder 1, %s24
      %p403 = scmp.lt.s32.totalorder %s24, 3
      %p404 = pnand %p402, %p403
      %p405 = pneg %p404
      // Predicated region
      $region61: #{tpu_custom_call.1} parent=5 // pred_check
        _
      $region62: #{tpu_custom_call.1} parent=5 // pred_check_branch
        %407 = sbr.rel (%p404) target = $region64
      $region63: #{tpu_custom_call.1} parent=5 // pred_region
        %s408 = ssub.s32 %s24, 1
        // Predicated region
        $region65: #{tpu_custom_call.1} parent=63 // pred_check
          %p409 = pneg %p45
        $region66: #{tpu_custom_call.1} parent=63 // pred_check_branch
          %411 = sbr.rel (%p409) target = $region68
        $region67: #{tpu_custom_call.1} parent=63 // pred_region
          %412 = dma.done [#allocation5], 16
        $region68: #{tpu_custom_call.1} parent=63 // pred_fallthru
          _
        %413 = sfence
        %p414 = pneg %p45
        %p415 = pneg %p42
        %p416 = pneg %p66
        %p417 = pneg %p63
        %p418 = scmp.lt.s32.totalorder %s29, 1
        %s419 = scalar_select %p418, %s29, 1
        %s420 = smul.addr %s419, 4
        %s421 = smul.addr %s420, 8
        %s422 = scalar_lea.vmem %s2, %s421
        %p423 = pneg %p92
        %p424 = pneg %p89
        %p425 = scmp.lt.s32.totalorder %s29, 1
        %s426 = scalar_select %p425, %s29, 1
        %s427 = smul.addr %s426, 4
        %s428 = smul.addr %s427, 8
        %s429 = scalar_lea.vmem %s3, %s428
        %p430 = pneg %p118
        %p431 = pneg %p115
        %p432 = scmp.lt.s32.totalorder %s29, 1
        %s433 = scalar_select %p432, %s29, 1
        %s434 = smul.addr %s433, 4
        %s435 = smul.addr %s434, 8
        %s436 = scalar_lea.vmem %s4, %s435
        %p437 = pneg %p144
        %p438 = pneg %p141
        %p439 = scmp.lt.s32.totalorder %s29, 1
        %s440 = scalar_select %p439, %s29, 1
        %s441 = smul.addr %s440, 2
        %s442 = smul.addr %s441, 8
        %s443 = scalar_lea.vmem %s5, %s442
        %p444 = pneg %p170
        %p445 = pneg %p167
        %p446 = pneg %p191
        %p447 = pneg %p188
        %p448 = pneg %p212
        %p449 = pneg %p209
        %p450 = pneg %p233
        %p451 = pneg %p230
        %p452 = pneg %p254
        %p453 = pneg %p251
        %p454 = pneg %p275
        %p455 = pneg %p272
        %p456 = pneg %p301
        %p457 = pneg %p298
        %s458 = sand.u32 %s288, 1
        %s459 = scalar_lea.sflag [#allocation4], %s458
        %s460 = sand.u32 %s288, 1
        %s461 = smul.addr %s460, 16
        %s462 = scalar_lea.vmem [#allocation6], %s461
        %p463 = pneg %p322
        %p464 = pneg %p319
        %p465 = scmp.lt.s32.totalorder %s29, 1
        %s466 = scalar_select %p465, %s29, 1
        %s467 = smul.addr %s466, 4
        %s468 = smul.addr %s467, 8
        %s469 = scalar_lea.vmem %s2, %s468
        %p470 = scmp.lt.s32.totalorder %s29, 1
        %s471 = scalar_select %p470, %s29, 1
        %s472 = smul.addr %s471, 4
        %s473 = smul.addr %s472, 8
        %s474 = scalar_lea.vmem %s3, %s473
        %p475 = scmp.lt.s32.totalorder %s29, 1
        %s476 = scalar_select %p475, %s29, 1
        %s477 = smul.addr %s476, 4
        %s478 = smul.addr %s477, 8
        %s479 = scalar_lea.vmem %s4, %s478
        %p480 = scmp.lt.s32.totalorder %s29, 1
        %s481 = scalar_select %p480, %s29, 1
        %s482 = smul.addr %s481, 2
        %s483 = smul.addr %s482, 8
        %s484 = scalar_lea.vmem %s5, %s483
        %p485 = scmp.eq.s32.totalorder %s29, 0
        // Predicated region
        $region69: #{tpu_custom_call.1} parent=63 // pred_check
          %p486 = pneg %p485
        $region70: #{tpu_custom_call.1} parent=63 // pred_check_branch
          %488 = sbr.rel (%p486) target = $region72
        $region71: #{tpu_custom_call.1} parent=63 // pred_region
          %vm489 = vcmask 261120
          %490 = vst.msk [vmem:[#allocation2] sm:$0xff] %vm489, 0.0
          %491 = vst.msk [vmem:[#allocation2 + $0x8] sm:$0xff] %vm489, 0.0
        $region72: #{tpu_custom_call.1} parent=63 // pred_fallthru
          _
        %v492 = vld [vmem:[%s1] sm:$0xff]
        %v493 = vld [vmem:[%s1 + $0x8] sm:$0xff]
        %v494 = vld [vmem:[%s469] sm:$0xff]
        %v495 = vld [vmem:[%s469 + $0x8] sm:$0xff]
        %v496 = vld [vmem:[%s469 + $0x10] sm:$0xff]
        %v497 = vld [vmem:[%s469 + $0x18] sm:$0xff]
        %vm498 = vcmask 261120
        %v500 = vsel %vm498, %v492, 0
        %v503 = vsel %vm498, %v493, 0
        %505 = vmatprep.subr.mxu0 0.0
        %506 = vmatpush1.msra.mxu0 %v494
        %507 = vmatprep.subr.mxu0 0.0
        %508 = vmatpush1.msra.mxu0 %v495
        %509 = vmatprep.subr.mxu0 0.0
        %510 = vmatpush1.msra.mxu0 %v496
        %511 = vmatprep.subr.mxu0 0.0
        %512 = vmatpush1.msra.mxu0 %v497
        %513 = vmatprep.subr.mxu0 0.0
        %514 = vmatpush1.msra.mxu0 0.0
        %515 = vmatprep.subr.mxu0 0.0
        %516 = vmatpush1.msra.mxu0 0.0
        %517 = vmatprep.subr.mxu0 0.0
        %518 = vmatpush1.msra.mxu0 0.0
        %519 = vmatprep.subr.mxu0 0.0
        %520 = vmatpush1.msra.mxu0 0.0
        %521 = vmatprep.subr.mxu0 0.0
        %522 = vmatpush1.msra.mxu0 0.0
        %523 = vmatprep.subr.mxu0 0.0
        %524 = vmatpush1.msra.mxu0 0.0
        %525 = vmatprep.subr.mxu0 0.0
        %526 = vmatpush1.msra.mxu0 0.0
        %527 = vmatprep.subr.mxu0 0.0
        %528 = vmatpush1.msra.mxu0 0.0
        %529 = vmatprep.subr.mxu0 0.0
        %530 = vmatpush1.msra.mxu0 0.0
        %531 = vmatprep.subr.mxu0 0.0
        %532 = vmatpush1.msra.mxu0 0.0
        %533 = vmatprep.subr.mxu0 0.0
        %534 = vmatpush1.msra.mxu0 0.0
        %535 = vmatprep.subr.mxu0 0.0
        %536 = vmatpush1.msra.mxu0 0.0
        %537 = vmatprep.subr.mxu0 0.0
        %538 = vmatpush1.msra.mxu0 0.0
        %539 = vmatprep.subr.mxu0 0.0
        %540 = vmatpush1.msra.mxu0 0.0
        %541 = vmatprep.subr.mxu0 0.0
        %542 = vmatpush1.msra.mxu0 0.0
        %543 = vmatprep.subr.mxu0 0.0
        %544 = vmatpush1.msra.mxu0 0.0
        %545 = vmatprep.subr.mxu0 0.0
        %546 = vmatpush1.msra.mxu0 0.0
        %547 = vmatprep.subr.mxu0 0.0
        %548 = vmatpush1.msra.mxu0 0.0
        %549 = vmatprep.subr.mxu0 0.0
        %550 = vmatpush1.msra.mxu0 0.0
        %551 = vmatprep.subr.mxu0 0.0
        %552 = vmatpush1.msra.mxu0 0.0
        %553 = vmatprep.subr.mxu0 0.0
        %554 = vmatpush1.msra.mxu0 0.0
        %555 = vmatprep.subr.mxu0 0.0
        %556 = vmatpush1.msra.mxu0 0.0
        %557 = vmatprep.subr.mxu0 0.0
        %558 = vmatpush1.msra.mxu0 0.0
        %559 = vmatprep.subr.mxu0 0.0
        %560 = vmatpush1.msra.mxu0 0.0
        %561 = vmatprep.subr.mxu0 0.0
        %562 = vmatpush1.msra.mxu0 0.0
        %563 = vmatprep.subr.mxu0 0.0
        %564 = vmatpush1.msra.mxu0 0.0
        %565 = vmatprep.subr.mxu0 0.0
        %566 = vmatpush1.msra.mxu0 0.0
        %567 = vmatprep.subr.mxu0 0.0
        %568 = vmatpush1.msra.mxu0 0.0
        %569 = vmatprep.mubr.f32.mxu0 0.0
        %570 = vmatmul.mubr.f32.gmra.mrb[0].mxu0 %v500
        %v571 = vpop.f32.mrb[0].mxu0
        %v572 = vadd.f32 0.0, %v571
        %v573 = vpop.f32.mrb[0].mxu0
        %574 = vmatprep.mubr.f32.mxu0 0.0
        %575 = vmatmul.mubr.f32.gmra.mrb[0].mxu0 %v503
        %v576 = vpop.f32.mrb[0].mxu0
        %v577 = vadd.f32 0.0, %v576
        %v578 = vpop.f32.mrb[0].mxu0
        %579 = vdwg.mxu0
        %v580 = vld [vmem:[%s474] sm:$0xff]
        %v581 = vld [vmem:[%s474 + $0x8] sm:$0xff]
        %v582 = vld [vmem:[%s474 + $0x10] sm:$0xff]
        %v583 = vld [vmem:[%s474 + $0x18] sm:$0xff]
        %584 = vmatprep.subr.mxu0 0.0
        %585 = vmatpush1.msra.mxu0 %v580
        %586 = vmatprep.subr.mxu0 0.0
        %587 = vmatpush1.msra.mxu0 %v581
        %588 = vmatprep.subr.mxu0 0.0
        %589 = vmatpush1.msra.mxu0 %v582
        %590 = vmatprep.subr.mxu0 0.0
        %591 = vmatpush1.msra.mxu0 %v583
        %592 = vmatprep.subr.mxu0 0.0
        %593 = vmatpush1.msra.mxu0 0.0
        %594 = vmatprep.subr.mxu0 0.0
        %595 = vmatpush1.msra.mxu0 0.0
        %596 = vmatprep.subr.mxu0 0.0
        %597 = vmatpush1.msra.mxu0 0.0
        %598 = vmatprep.subr.mxu0 0.0
        %599 = vmatpush1.msra.mxu0 0.0
        %600 = vmatprep.subr.mxu0 0.0
        %601 = vmatpush1.msra.mxu0 0.0
        %602 = vmatprep.subr.mxu0 0.0
        %603 = vmatpush1.msra.mxu0 0.0
        %604 = vmatprep.subr.mxu0 0.0
        %605 = vmatpush1.msra.mxu0 0.0
        %606 = vmatprep.subr.mxu0 0.0
        %607 = vmatpush1.msra.mxu0 0.0
        %608 = vmatprep.subr.mxu0 0.0
        %609 = vmatpush1.msra.mxu0 0.0
        %610 = vmatprep.subr.mxu0 0.0
        %611 = vmatpush1.msra.mxu0 0.0
        %612 = vmatprep.subr.mxu0 0.0
        %613 = vmatpush1.msra.mxu0 0.0
        %614 = vmatprep.subr.mxu0 0.0
        %615 = vmatpush1.msra.mxu0 0.0
        %616 = vmatprep.subr.mxu0 0.0
        %617 = vmatpush1.msra.mxu0 0.0
        %618 = vmatprep.subr.mxu0 0.0
        %619 = vmatpush1.msra.mxu0 0.0
        %620 = vmatprep.subr.mxu0 0.0
        %621 = vmatpush1.msra.mxu0 0.0
        %622 = vmatprep.subr.mxu0 0.0
        %623 = vmatpush1.msra.mxu0 0.0
        %624 = vmatprep.subr.mxu0 0.0
        %625 = vmatpush1.msra.mxu0 0.0
        %626 = vmatprep.subr.mxu0 0.0
        %627 = vmatpush1.msra.mxu0 0.0
        %628 = vmatprep.subr.mxu0 0.0
        %629 = vmatpush1.msra.mxu0 0.0
        %630 = vmatprep.subr.mxu0 0.0
        %631 = vmatpush1.msra.mxu0 0.0
        %632 = vmatprep.subr.mxu0 0.0
        %633 = vmatpush1.msra.mxu0 0.0
        %634 = vmatprep.subr.mxu0 0.0
        %635 = vmatpush1.msra.mxu0 0.0
        %636 = vmatprep.subr.mxu0 0.0
        %637 = vmatpush1.msra.mxu0 0.0
        %638 = vmatprep.subr.mxu0 0.0
        %639 = vmatpush1.msra.mxu0 0.0
        %640 = vmatprep.subr.mxu0 0.0
        %641 = vmatpush1.msra.mxu0 0.0
        %642 = vmatprep.subr.mxu0 0.0
        %643 = vmatpush1.msra.mxu0 0.0
        %644 = vmatprep.subr.mxu0 0.0
        %645 = vmatpush1.msra.mxu0 0.0
        %646 = vmatprep.subr.mxu0 0.0
        %647 = vmatpush1.msra.mxu0 0.0
        %648 = vmatprep.mubr.f32.mxu0 0.0
        %649 = vmatmul.mubr.f32.gmra.mrb[0].mxu0 %v500
        %v650 = vpop.f32.mrb[0].mxu0
        %v651 = vadd.f32 0.0, %v650
        %v652 = vpop.f32.mrb[0].mxu0
        %653 = vmatprep.mubr.f32.mxu0 0.0
        %654 = vmatmul.mubr.f32.gmra.mrb[0].mxu0 %v503
        %v655 = vpop.f32.mrb[0].mxu0
        %v656 = vadd.f32 0.0, %v655
        %v657 = vpop.f32.mrb[0].mxu0
        %658 = vdwg.mxu0
        %v659 = vld [vmem:[%s479] sm:$0xff]
        %v660 = vld [vmem:[%s479 + $0x8] sm:$0xff]
        %v661 = vld [vmem:[%s479 + $0x10] sm:$0xff]
        %v662 = vld [vmem:[%s479 + $0x18] sm:$0xff]
        %663 = vmatprep.subr.mxu0 0.0
        %664 = vmatpush1.msra.mxu0 %v659
        %665 = vmatprep.subr.mxu0 0.0
        %666 = vmatpush1.msra.mxu0 %v660
        %667 = vmatprep.subr.mxu0 0.0
        %668 = vmatpush1.msra.mxu0 %v661
        %669 = vmatprep.subr.mxu0 0.0
        %670 = vmatpush1.msra.mxu0 %v662
        %671 = vmatprep.subr.mxu0 0.0
        %672 = vmatpush1.msra.mxu0 0.0
        %673 = vmatprep.subr.mxu0 0.0
        %674 = vmatpush1.msra.mxu0 0.0
        %675 = vmatprep.subr.mxu0 0.0
        %676 = vmatpush1.msra.mxu0 0.0
        %677 = vmatprep.subr.mxu0 0.0
        %678 = vmatpush1.msra.mxu0 0.0
        %679 = vmatprep.subr.mxu0 0.0
        %680 = vmatpush1.msra.mxu0 0.0
        %681 = vmatprep.subr.mxu0 0.0
        %682 = vmatpush1.msra.mxu0 0.0
        %683 = vmatprep.subr.mxu0 0.0
        %684 = vmatpush1.msra.mxu0 0.0
        %685 = vmatprep.subr.mxu0 0.0
        %686 = vmatpush1.msra.mxu0 0.0
        %687 = vmatprep.subr.mxu0 0.0
        %688 = vmatpush1.msra.mxu0 0.0
        %689 = vmatprep.subr.mxu0 0.0
        %690 = vmatpush1.msra.mxu0 0.0
        %691 = vmatprep.subr.mxu0 0.0
        %692 = vmatpush1.msra.mxu0 0.0
        %693 = vmatprep.subr.mxu0 0.0
        %694 = vmatpush1.msra.mxu0 0.0
        %695 = vmatprep.subr.mxu0 0.0
        %696 = vmatpush1.msra.mxu0 0.0
        %697 = vmatprep.subr.mxu0 0.0
        %698 = vmatpush1.msra.mxu0 0.0
        %699 = vmatprep.subr.mxu0 0.0
        %700 = vmatpush1.msra.mxu0 0.0
        %701 = vmatprep.subr.mxu0 0.0
        %702 = vmatpush1.msra.mxu0 0.0
        %703 = vmatprep.subr.mxu0 0.0
        %704 = vmatpush1.msra.mxu0 0.0
        %705 = vmatprep.subr.mxu0 0.0
        %706 = vmatpush1.msra.mxu0 0.0
        %707 = vmatprep.subr.mxu0 0.0
        %708 = vmatpush1.msra.mxu0 0.0
        %709 = vmatprep.subr.mxu0 0.0
        %710 = vmatpush1.msra.mxu0 0.0
        %711 = vmatprep.subr.mxu0 0.0
        %712 = vmatpush1.msra.mxu0 0.0
        %713 = vmatprep.subr.mxu0 0.0
        %714 = vmatpush1.msra.mxu0 0.0
        %715 = vmatprep.subr.mxu0 0.0
        %716 = vmatpush1.msra.mxu0 0.0
        %717 = vmatprep.subr.mxu0 0.0
        %718 = vmatpush1.msra.mxu0 0.0
        %719 = vmatprep.subr.mxu0 0.0
        %720 = vmatpush1.msra.mxu0 0.0
        %721 = vmatprep.subr.mxu0 0.0
        %722 = vmatpush1.msra.mxu0 0.0
        %723 = vmatprep.subr.mxu0 0.0
        %724 = vmatpush1.msra.mxu0 0.0
        %725 = vmatprep.subr.mxu0 0.0
        %726 = vmatpush1.msra.mxu0 0.0
        %727 = vmatprep.mubr.f32.mxu0 0.0
        %728 = vmatmul.mubr.f32.gmra.mrb[0].mxu0 %v500
        %v729 = vpop.f32.mrb[0].mxu0
        %v730 = vadd.f32 0.0, %v729
        %v731 = vpop.f32.mrb[0].mxu0
        %732 = vmatprep.mubr.f32.mxu0 0.0
        %733 = vmatmul.mubr.f32.gmra.mrb[0].mxu0 %v503
        %v734 = vpop.f32.mrb[0].mxu0
        %v735 = vadd.f32 0.0, %v734
        %v736 = vpop.f32.mrb[0].mxu0
        %737 = vdwg.mxu0
        %vm738 = vcmask 130048
        %v740 = vsel %vm738, %v572, 0
        %v743 = vsel %vm738, %v577, 0
        %v746 = vsel %vm738, %v651, 0
        %v749 = vsel %vm738, %v656, 0
        %751 = vmatprep.subr.mxu0 0.0
        %752 = vmatpush1.xpose.msra.mxu0 %v746
        %753 = vmatprep.subr.mxu0 0.0
        %754 = vmatpush1.xpose.msra.mxu0 %v749
        %755 = vmatprep.subr.mxu0 0.0
        %756 = vmatpush1.xpose.msra.mxu0 0.0
        %757 = vmatprep.subr.mxu0 0.0
        %758 = vmatpush1.xpose.msra.mxu0 0.0
        %759 = vmatprep.subr.mxu0 0.0
        %760 = vmatpush1.xpose.msra.mxu0 0.0
        %761 = vmatprep.subr.mxu0 0.0
        %762 = vmatpush1.xpose.msra.mxu0 0.0
        %763 = vmatprep.subr.mxu0 0.0
        %764 = vmatpush1.xpose.msra.mxu0 0.0
        %765 = vmatprep.subr.mxu0 0.0
        %766 = vmatpush1.xpose.msra.mxu0 0.0
        %767 = vmatprep.subr.mxu0 0.0
        %768 = vmatpush1.xpose.msra.mxu0 0.0
        %769 = vmatprep.subr.mxu0 0.0
        %770 = vmatpush1.xpose.msra.mxu0 0.0
        %771 = vmatprep.subr.mxu0 0.0
        %772 = vmatpush1.xpose.msra.mxu0 0.0
        %773 = vmatprep.subr.mxu0 0.0
        %774 = vmatpush1.xpose.msra.mxu0 0.0
        %775 = vmatprep.subr.mxu0 0.0
        %776 = vmatpush1.xpose.msra.mxu0 0.0
        %777 = vmatprep.subr.mxu0 0.0
        %778 = vmatpush1.xpose.msra.mxu0 0.0
        %779 = vmatprep.subr.mxu0 0.0
        %780 = vmatpush1.xpose.msra.mxu0 0.0
        %781 = vmatprep.subr.mxu0 0.0
        %782 = vmatpush1.xpose.msra.mxu0 0.0
        %783 = vmatprep.subr.mxu0 0.0
        %784 = vmatpush1.xpose.msra.mxu0 0.0
        %785 = vmatprep.subr.mxu0 0.0
        %786 = vmatpush1.xpose.msra.mxu0 0.0
        %787 = vmatprep.subr.mxu0 0.0
        %788 = vmatpush1.xpose.msra.mxu0 0.0
        %789 = vmatprep.subr.mxu0 0.0
        %790 = vmatpush1.xpose.msra.mxu0 0.0
        %791 = vmatprep.subr.mxu0 0.0
        %792 = vmatpush1.xpose.msra.mxu0 0.0
        %793 = vmatprep.subr.mxu0 0.0
        %794 = vmatpush1.xpose.msra.mxu0 0.0
        %795 = vmatprep.subr.mxu0 0.0
        %796 = vmatpush1.xpose.msra.mxu0 0.0
        %797 = vmatprep.subr.mxu0 0.0
        %798 = vmatpush1.xpose.msra.mxu0 0.0
        %799 = vmatprep.subr.mxu0 0.0
        %800 = vmatpush1.xpose.msra.mxu0 0.0
        %801 = vmatprep.subr.mxu0 0.0
        %802 = vmatpush1.xpose.msra.mxu0 0.0
        %803 = vmatprep.subr.mxu0 0.0
        %804 = vmatpush1.xpose.msra.mxu0 0.0
        %805 = vmatprep.subr.mxu0 0.0
        %806 = vmatpush1.xpose.msra.mxu0 0.0
        %807 = vmatprep.subr.mxu0 0.0
        %808 = vmatpush1.xpose.msra.mxu0 0.0
        %809 = vmatprep.subr.mxu0 0.0
        %810 = vmatpush1.xpose.msra.mxu0 0.0
        %811 = vmatprep.subr.mxu0 0.0
        %812 = vmatpush1.xpose.msra.mxu0 0.0
        %813 = vmatprep.subr.mxu0 0.0
        %814 = vmatpush1.xpose.msra.mxu0 0.0
        %815 = vmatprep.mubr.f32.mxu0 0.0
        %816 = vmatmul.mubr.f32.gmra.mrb[0].mxu0 %v740
        %v817 = vpop.f32.mrb[0].mxu0
        %v818 = vadd.f32 0.0, %v817
        %v819 = vpop.f32.mrb[0].mxu0
        %820 = vmatprep.mubr.f32.mxu0 0.0
        %821 = vmatmul.mubr.f32.gmra.mrb[0].mxu0 %v743
        %v822 = vpop.f32.mrb[0].mxu0
        %v823 = vadd.f32 0.0, %v822
        %v824 = vpop.f32.mrb[0].mxu0
        %825 = vdwg.mxu0
        %v826 = vmul.f32 %v818, 0.25
        %v827 = vmul.f32 %v823, 0.25
        %v828 = vlaneseq
        %v829 = vshrl.u32 %v828, 7
        %v830 = vadd.s32 %v829, 8
        %v831 = vlaneseq
        %v832 = vand.u32 %v831, 127
        %vm833 = vcmp.le.s32.totalorder %v832, %v829
        %vm834 = vcmp.le.s32.totalorder %v832, %v830
        %v835 = vsel %vm833, %v826, -inf
        %v836 = vsel %vm834, %v827, -inf
        %v837 = vsel %vm738, %v835, -inf
        %838 = vmax.xlane.f32.xlu0 %v837
        %v839 = vpop.xlane.xlu0 %838
        %v840 = vsel %vm738, %v836, -inf
        %841 = vmax.xlane.f32.xlu0 %v840
        %v842 = vpop.xlane.xlu0 %841
        %v843 = vsub.f32 %v835, %v839
        %v844 = vsub.f32 %v836, %v842
        %v845 = vmul.f32 %v843, 1.442695
        %v846 = vpow.pop %v845
        %v847 = vmul.f32 %v844, 1.442695
        %v848 = vpow.pop %v847
        %v849 = vsel %vm738, %v846, 0.0
        %850 = vadd.xlane.f32.xlu0 %v849
        %v851 = vpop.xlane.xlu0 %850
        %v852 = vsel %vm738, %v848, 0.0
        %853 = vadd.xlane.f32.xlu0 %v852
        %v854 = vpop.xlane.xlu0 %853
        %v855 = vrcp.pop %v851
        %v856 = vmul.f32 %v846, %v855
        %v857 = vrcp.pop %v854
        %v858 = vmul.f32 %v848, %v857
        %859 = vst.msk [vmem:[%s462] sm:$0xff] %vm738, %v856
        %860 = vst.msk [vmem:[%s462 + $0x8] sm:$0xff] %vm738, %v858
        %v862 = vsel %vm738, %v856, 0
        %v865 = vsel %vm738, %v858, 0
        %867 = vmatprep.subr.mxu0 0.0
        %868 = vmatpush1.msra.mxu0 %v730
        %869 = vmatprep.subr.mxu0 0.0
        %870 = vmatpush1.msra.mxu0 %v735
        %871 = vmatprep.subr.mxu0 0.0
        %872 = vmatpush1.msra.mxu0 0.0
        %873 = vmatprep.subr.mxu0 0.0
        %874 = vmatpush1.msra.mxu0 0.0
        %875 = vmatprep.subr.mxu0 0.0
        %876 = vmatpush1.msra.mxu0 0.0
        %877 = vmatprep.subr.mxu0 0.0
        %878 = vmatpush1.msra.mxu0 0.0
        %879 = vmatprep.subr.mxu0 0.0
        %880 = vmatpush1.msra.mxu0 0.0
        %881 = vmatprep.subr.mxu0 0.0
        %882 = vmatpush1.msra.mxu0 0.0
        %883 = vmatprep.subr.mxu0 0.0
        %884 = vmatpush1.msra.mxu0 0.0
        %885 = vmatprep.subr.mxu0 0.0
        %886 = vmatpush1.msra.mxu0 0.0
        %887 = vmatprep.subr.mxu0 0.0
        %888 = vmatpush1.msra.mxu0 0.0
        %889 = vmatprep.subr.mxu0 0.0
        %890 = vmatpush1.msra.mxu0 0.0
        %891 = vmatprep.subr.mxu0 0.0
        %892 = vmatpush1.msra.mxu0 0.0
        %893 = vmatprep.subr.mxu0 0.0
        %894 = vmatpush1.msra.mxu0 0.0
        %895 = vmatprep.subr.mxu0 0.0
        %896 = vmatpush1.msra.mxu0 0.0
        %897 = vmatprep.subr.mxu0 0.0
        %898 = vmatpush1.msra.mxu0 0.0
        %899 = vmatprep.subr.mxu0 0.0
        %900 = vmatpush1.msra.mxu0 0.0
        %901 = vmatprep.subr.mxu0 0.0
        %902 = vmatpush1.msra.mxu0 0.0
        %903 = vmatprep.subr.mxu0 0.0
        %904 = vmatpush1.msra.mxu0 0.0
        %905 = vmatprep.subr.mxu0 0.0
        %906 = vmatpush1.msra.mxu0 0.0
        %907 = vmatprep.subr.mxu0 0.0
        %908 = vmatpush1.msra.mxu0 0.0
        %909 = vmatprep.subr.mxu0 0.0
        %910 = vmatpush1.msra.mxu0 0.0
        %911 = vmatprep.subr.mxu0 0.0
        %912 = vmatpush1.msra.mxu0 0.0
        %913 = vmatprep.subr.mxu0 0.0
        %914 = vmatpush1.msra.mxu0 0.0
        %915 = vmatprep.subr.mxu0 0.0
        %916 = vmatpush1.msra.mxu0 0.0
        %917 = vmatprep.subr.mxu0 0.0
        %918 = vmatpush1.msra.mxu0 0.0
        %919 = vmatprep.subr.mxu0 0.0
        %920 = vmatpush1.msra.mxu0 0.0
        %921 = vmatprep.subr.mxu0 0.0
        %922 = vmatpush1.msra.mxu0 0.0
        %923 = vmatprep.subr.mxu0 0.0
        %924 = vmatpush1.msra.mxu0 0.0
        %925 = vmatprep.subr.mxu0 0.0
        %926 = vmatpush1.msra.mxu0 0.0
        %927 = vmatprep.subr.mxu0 0.0
        %928 = vmatpush1.msra.mxu0 0.0
        %929 = vmatprep.subr.mxu0 0.0
        %930 = vmatpush1.msra.mxu0 0.0
        %931 = vmatprep.mubr.f32.mxu0 0.0
        %932 = vmatmul.mubr.f32.gmra.mrb[0].mxu0 %v862
        %v933 = vpop.f32.mrb[0].mxu0
        %v934 = vadd.f32 0.0, %v933
        %v935 = vpop.f32.mrb[0].mxu0
        %936 = vmatprep.mubr.f32.mxu0 0.0
        %937 = vmatmul.mubr.f32.gmra.mrb[0].mxu0 %v865
        %v938 = vpop.f32.mrb[0].mxu0
        %v939 = vadd.f32 0.0, %v938
        %v940 = vpop.f32.mrb[0].mxu0
        %941 = vdwg.mxu0
        %v942 = vld [vmem:[#allocation2] sm:$0xff]
        %v943 = vld [vmem:[#allocation2 + $0x8] sm:$0xff]
        %v944 = vld [vmem:[%s484] sm:$0xff]
        %v945 = vld [vmem:[%s484 + $0x8] sm:$0xff]
        %v947 = vsel %vm738, %v934, 0
        %v950 = vsel %vm738, %v939, 0
        %952 = vmatprep.subr.mxu0 0.0
        %953 = vmatpush1.msra.mxu0 %v944
        %954 = vmatprep.subr.mxu0 0.0
        %955 = vmatpush1.msra.mxu0 %v945
        %956 = vmatprep.subr.mxu0 0.0
        %957 = vmatpush1.msra.mxu0 0.0
        %958 = vmatprep.subr.mxu0 0.0
        %959 = vmatpush1.msra.mxu0 0.0
        %960 = vmatprep.subr.mxu0 0.0
        %961 = vmatpush1.msra.mxu0 0.0
        %962 = vmatprep.subr.mxu0 0.0
        %963 = vmatpush1.msra.mxu0 0.0
        %964 = vmatprep.subr.mxu0 0.0
        %965 = vmatpush1.msra.mxu0 0.0
        %966 = vmatprep.subr.mxu0 0.0
        %967 = vmatpush1.msra.mxu0 0.0
        %968 = vmatprep.subr.mxu0 0.0
        %969 = vmatpush1.msra.mxu0 0.0
        %970 = vmatprep.subr.mxu0 0.0
        %971 = vmatpush1.msra.mxu0 0.0
        %972 = vmatprep.subr.mxu0 0.0
        %973 = vmatpush1.msra.mxu0 0.0
        %974 = vmatprep.subr.mxu0 0.0
        %975 = vmatpush1.msra.mxu0 0.0
        %976 = vmatprep.subr.mxu0 0.0
        %977 = vmatpush1.msra.mxu0 0.0
        %978 = vmatprep.subr.mxu0 0.0
        %979 = vmatpush1.msra.mxu0 0.0
        %980 = vmatprep.subr.mxu0 0.0
        %981 = vmatpush1.msra.mxu0 0.0
        %982 = vmatprep.subr.mxu0 0.0
        %983 = vmatpush1.msra.mxu0 0.0
        %984 = vmatprep.subr.mxu0 0.0
        %985 = vmatpush1.msra.mxu0 0.0
        %986 = vmatprep.subr.mxu0 0.0
        %987 = vmatpush1.msra.mxu0 0.0
        %988 = vmatprep.subr.mxu0 0.0
        %989 = vmatpush1.msra.mxu0 0.0
        %990 = vmatprep.subr.mxu0 0.0
        %991 = vmatpush1.msra.mxu0 0.0
        %992 = vmatprep.subr.mxu0 0.0
        %993 = vmatpush1.msra.mxu0 0.0
        %994 = vmatprep.subr.mxu0 0.0
        %995 = vmatpush1.msra.mxu0 0.0
        %996 = vmatprep.subr.mxu0 0.0
        %997 = vmatpush1.msra.mxu0 0.0
        %998 = vmatprep.subr.mxu0 0.0
        %999 = vmatpush1.msra.mxu0 0.0
        %1000 = vmatprep.subr.mxu0 0.0
        %1001 = vmatpush1.msra.mxu0 0.0
        %1002 = vmatprep.subr.mxu0 0.0
        %1003 = vmatpush1.msra.mxu0 0.0
        %1004 = vmatprep.subr.mxu0 0.0
        %1005 = vmatpush1.msra.mxu0 0.0
        %1006 = vmatprep.subr.mxu0 0.0
        %1007 = vmatpush1.msra.mxu0 0.0
        %1008 = vmatprep.subr.mxu0 0.0
        %1009 = vmatpush1.msra.mxu0 0.0
        %1010 = vmatprep.subr.mxu0 0.0
        %1011 = vmatpush1.msra.mxu0 0.0
        %1012 = vmatprep.subr.mxu0 0.0
        %1013 = vmatpush1.msra.mxu0 0.0
        %1014 = vmatprep.subr.mxu0 0.0
        %1015 = vmatpush1.msra.mxu0 0.0
        %1016 = vmatprep.mubr.f32.mxu0 0.0
        %1017 = vmatmul.mubr.f32.gmra.mrb[0].mxu0 %v947
        %v1018 = vpop.f32.mrb[0].mxu0
        %v1019 = vadd.f32 0.0, %v1018
        %v1020 = vpop.f32.mrb[0].mxu0
        %1021 = vmatprep.mubr.f32.mxu0 0.0
        %1022 = vmatmul.mubr.f32.gmra.mrb[0].mxu0 %v950
        %v1023 = vpop.f32.mrb[0].mxu0
        %v1024 = vadd.f32 0.0, %v1023
        %v1025 = vpop.f32.mrb[0].mxu0
        %1026 = vdwg.mxu0
        %v1027 = vadd.f32 %v942, %v1019
        %v1028 = vadd.f32 %v943, %v1024
        %1029 = vst.msk [vmem:[#allocation2] sm:$0xff] %vm498, %v1027
        %1030 = vst.msk [vmem:[#allocation2 + $0x8] sm:$0xff] %vm498, %v1028
        %p1031 = scmp.eq.s32.totalorder %s29, 1
        // Predicated region
        $region73: #{tpu_custom_call.1} parent=63 // pred_check
          %p1032 = pneg %p1031
        $region74: #{tpu_custom_call.1} parent=63 // pred_check_branch
          %1034 = sbr.rel (%p1032) target = $region76
        $region75: #{tpu_custom_call.1} parent=63 // pred_region
          %v1035 = vld [vmem:[#allocation2] sm:$0xff]
          %v1036 = vld [vmem:[#allocation2 + $0x8] sm:$0xff]
          %v1037 = vadd.f32 %v492, %v1035
          %v1038 = vadd.f32 %v493, %v1036
          %v1039 = vld [vmem:[%s6] sm:$0x1]
          %v1041 = vlaneseq
          %v1042 = vshrl.u32 %v1041, 7
          %v1043 = vsub.s32 0, %v1042
          %v1044 = vrot.slane %v1039, %v1043
          %v1046 = vadd.f32 %v1037, %v1044
          %v1047 = vadd.f32 %v1038, %v1044
          %v1048 = vld [vmem:[%s7] sm:$0xff]
          %v1049 = vld [vmem:[%s7 + $0x8] sm:$0xff]
          %v1050 = vld [vmem:[%s7 + $0x10] sm:$0xff]
          %v1051 = vld [vmem:[%s7 + $0x18] sm:$0xff]
          %v1052 = vld [vmem:[%s8] sm:$0x1]
          %v1054 = vlaneseq
          %v1055 = vshrl.u32 %v1054, 7
          %v1056 = vsub.s32 0, %v1055
          %v1057 = vrot.slane %v1052, %v1056
          %v1060 = vsel %vm498, %v1046, 0
          %v1063 = vsel %vm498, %v1047, 0
          %1065 = vmatprep.subr.mxu0 0.0
          %1066 = vmatpush1.msra.mxu0 %v1048
          %1067 = vmatprep.subr.mxu0 0.0
          %1068 = vmatpush1.msra.mxu0 %v1049
          %1069 = vmatprep.subr.mxu0 0.0
          %1070 = vmatpush1.msra.mxu0 %v1050
          %1071 = vmatprep.subr.mxu0 0.0
          %1072 = vmatpush1.msra.mxu0 %v1051
          %1073 = vmatprep.subr.mxu0 0.0
          %1074 = vmatpush1.msra.mxu0 0.0
          %1075 = vmatprep.subr.mxu0 0.0
          %1076 = vmatpush1.msra.mxu0 0.0
          %1077 = vmatprep.subr.mxu0 0.0
          %1078 = vmatpush1.msra.mxu0 0.0
          %1079 = vmatprep.subr.mxu0 0.0
          %1080 = vmatpush1.msra.mxu0 0.0
          %1081 = vmatprep.subr.mxu0 0.0
          %1082 = vmatpush1.msra.mxu0 0.0
          %1083 = vmatprep.subr.mxu0 0.0
          %1084 = vmatpush1.msra.mxu0 0.0
          %1085 = vmatprep.subr.mxu0 0.0
          %1086 = vmatpush1.msra.mxu0 0.0
          %1087 = vmatprep.subr.mxu0 0.0
          %1088 = vmatpush1.msra.mxu0 0.0
          %1089 = vmatprep.subr.mxu0 0.0
          %1090 = vmatpush1.msra.mxu0 0.0
          %1091 = vmatprep.subr.mxu0 0.0
          %1092 = vmatpush1.msra.mxu0 0.0
          %1093 = vmatprep.subr.mxu0 0.0
          %1094 = vmatpush1.msra.mxu0 0.0
          %1095 = vmatprep.subr.mxu0 0.0
          %1096 = vmatpush1.msra.mxu0 0.0
          %1097 = vmatprep.subr.mxu0 0.0
          %1098 = vmatpush1.msra.mxu0 0.0
          %1099 = vmatprep.subr.mxu0 0.0
          %1100 = vmatpush1.msra.mxu0 0.0
          %1101 = vmatprep.subr.mxu0 0.0
          %1102 = vmatpush1.msra.mxu0 0.0
          %1103 = vmatprep.subr.mxu0 0.0
          %1104 = vmatpush1.msra.mxu0 0.0
          %1105 = vmatprep.subr.mxu0 0.0
          %1106 = vmatpush1.msra.mxu0 0.0
          %1107 = vmatprep.subr.mxu0 0.0
          %1108 = vmatpush1.msra.mxu0 0.0
          %1109 = vmatprep.subr.mxu0 0.0
          %1110 = vmatpush1.msra.mxu0 0.0
          %1111 = vmatprep.subr.mxu0 0.0
          %1112 = vmatpush1.msra.mxu0 0.0
          %1113 = vmatprep.subr.mxu0 0.0
          %1114 = vmatpush1.msra.mxu0 0.0
          %1115 = vmatprep.subr.mxu0 0.0
          %1116 = vmatpush1.msra.mxu0 0.0
          %1117 = vmatprep.subr.mxu0 0.0
          %1118 = vmatpush1.msra.mxu0 0.0
          %1119 = vmatprep.subr.mxu0 0.0
          %1120 = vmatpush1.msra.mxu0 0.0
          %1121 = vmatprep.subr.mxu0 0.0
          %1122 = vmatpush1.msra.mxu0 0.0
          %1123 = vmatprep.subr.mxu0 0.0
          %1124 = vmatpush1.msra.mxu0 0.0
          %1125 = vmatprep.subr.mxu0 0.0
          %1126 = vmatpush1.msra.mxu0 0.0
          %1127 = vmatprep.subr.mxu0 0.0
          %1128 = vmatpush1.msra.mxu0 0.0
          %1129 = vmatprep.mubr.f32.mxu0 0.0
          %1130 = vmatmul.mubr.f32.gmra.mrb[0].mxu0 %v1060
          %v1131 = vpop.f32.mrb[0].mxu0
          %v1132 = vadd.f32 %v1057, %v1131
          %v1133 = vpop.f32.mrb[0].mxu0
          %1134 = vmatprep.mubr.f32.mxu0 0.0
          %1135 = vmatmul.mubr.f32.gmra.mrb[0].mxu0 %v1063
          %v1136 = vpop.f32.mrb[0].mxu0
          %v1137 = vadd.f32 %v1057, %v1136
          %v1138 = vpop.f32.mrb[0].mxu0
          %1139 = vdwg.mxu0
          %v1140 = vmax.f32 %v1132, 0.0
          %v1141 = vmax.f32 %v1137, 0.0
          %v1142 = vld [vmem:[%s9] sm:$0xff]
          %v1143 = vld [vmem:[%s9 + $0x8] sm:$0xff]
          %v1144 = vld [vmem:[%s9 + $0x10] sm:$0xff]
          %v1145 = vld [vmem:[%s9 + $0x18] sm:$0xff]
          %v1146 = vld [vmem:[%s9 + $0x20] sm:$0xff]
          %v1147 = vld [vmem:[%s9 + $0x28] sm:$0xff]
          %v1148 = vld [vmem:[%s9 + $0x30] sm:$0xff]
          %v1149 = vld [vmem:[%s9 + $0x38] sm:$0xff]
          %vm1150 = vcmask 523264
          %v1152 = vsel %vm1150, %v1140, 0
          %v1155 = vsel %vm1150, %v1141, 0
          %1157 = vmatprep.subr.mxu0 0.0
          %1158 = vmatpush1.msra.mxu0 %v1142
          %1159 = vmatprep.subr.mxu0 0.0
          %1160 = vmatpush1.msra.mxu0 %v1143
          %1161 = vmatprep.subr.mxu0 0.0
          %1162 = vmatpush1.msra.mxu0 %v1144
          %1163 = vmatprep.subr.mxu0 0.0
          %1164 = vmatpush1.msra.mxu0 %v1145
          %1165 = vmatprep.subr.mxu0 0.0
          %1166 = vmatpush1.msra.mxu0 %v1146
          %1167 = vmatprep.subr.mxu0 0.0
          %1168 = vmatpush1.msra.mxu0 %v1147
          %1169 = vmatprep.subr.mxu0 0.0
          %1170 = vmatpush1.msra.mxu0 %v1148
          %1171 = vmatprep.subr.mxu0 0.0
          %1172 = vmatpush1.msra.mxu0 %v1149
          %1173 = vmatprep.subr.mxu0 0.0
          %1174 = vmatpush1.msra.mxu0 0.0
          %1175 = vmatprep.subr.mxu0 0.0
          %1176 = vmatpush1.msra.mxu0 0.0
          %1177 = vmatprep.subr.mxu0 0.0
          %1178 = vmatpush1.msra.mxu0 0.0
          %1179 = vmatprep.subr.mxu0 0.0
          %1180 = vmatpush1.msra.mxu0 0.0
          %1181 = vmatprep.subr.mxu0 0.0
          %1182 = vmatpush1.msra.mxu0 0.0
          %1183 = vmatprep.subr.mxu0 0.0
          %1184 = vmatpush1.msra.mxu0 0.0
          %1185 = vmatprep.subr.mxu0 0.0
          %1186 = vmatpush1.msra.mxu0 0.0
          %1187 = vmatprep.subr.mxu0 0.0
          %1188 = vmatpush1.msra.mxu0 0.0
          %1189 = vmatprep.subr.mxu0 0.0
          %1190 = vmatpush1.msra.mxu0 0.0
          %1191 = vmatprep.subr.mxu0 0.0
          %1192 = vmatpush1.msra.mxu0 0.0
          %1193 = vmatprep.subr.mxu0 0.0
          %1194 = vmatpush1.msra.mxu0 0.0
          %1195 = vmatprep.subr.mxu0 0.0
          %1196 = vmatpush1.msra.mxu0 0.0
          %1197 = vmatprep.subr.mxu0 0.0
          %1198 = vmatpush1.msra.mxu0 0.0
          %1199 = vmatprep.subr.mxu0 0.0
          %1200 = vmatpush1.msra.mxu0 0.0
          %1201 = vmatprep.subr.mxu0 0.0
          %1202 = vmatpush1.msra.mxu0 0.0
          %1203 = vmatprep.subr.mxu0 0.0
          %1204 = vmatpush1.msra.mxu0 0.0
          %1205 = vmatprep.subr.mxu0 0.0
          %1206 = vmatpush1.msra.mxu0 0.0
          %1207 = vmatprep.subr.mxu0 0.0
          %1208 = vmatpush1.msra.mxu0 0.0
          %1209 = vmatprep.subr.mxu0 0.0
          %1210 = vmatpush1.msra.mxu0 0.0
          %1211 = vmatprep.subr.mxu0 0.0
          %1212 = vmatpush1.msra.mxu0 0.0
          %1213 = vmatprep.subr.mxu0 0.0
          %1214 = vmatpush1.msra.mxu0 0.0
          %1215 = vmatprep.subr.mxu0 0.0
          %1216 = vmatpush1.msra.mxu0 0.0
          %1217 = vmatprep.subr.mxu0 0.0
          %1218 = vmatpush1.msra.mxu0 0.0
          %1219 = vmatprep.subr.mxu0 0.0
          %1220 = vmatpush1.msra.mxu0 0.0
          %1221 = vmatprep.mubr.f32.mxu0 0.0
          %1222 = vmatmul.mubr.f32.gmra.mrb[0].mxu0 %v1152
          %v1223 = vpop.f32.mrb[0].mxu0
          %v1224 = vadd.f32 0.0, %v1223
          %v1225 = vpop.f32.mrb[0].mxu0
          %1226 = vmatprep.mubr.f32.mxu0 0.0
          %1227 = vmatmul.mubr.f32.gmra.mrb[0].mxu0 %v1155
          %v1228 = vpop.f32.mrb[0].mxu0
          %v1229 = vadd.f32 0.0, %v1228
          %v1230 = vpop.f32.mrb[0].mxu0
          %1231 = vdwg.mxu0
          %v1232 = vadd.f32 %v1046, %v1224
          %v1233 = vadd.f32 %v1047, %v1229
          %v1234 = vld [vmem:[%s10] sm:$0x1]
          %v1236 = vlaneseq
          %v1237 = vshrl.u32 %v1236, 7
          %v1238 = vsub.s32 0, %v1237
          %v1239 = vrot.slane %v1234, %v1238
          %v1241 = vadd.f32 %v1232, %v1239
          %v1242 = vadd.f32 %v1233, %v1239
          %1243 = vst.msk [vmem:[#allocation7] sm:$0xff] %vm498, %v1241
          %1244 = vst.msk [vmem:[#allocation7 + $0x8] sm:$0xff] %vm498, %v1242
        $region76: #{tpu_custom_call.1} parent=63 // pred_fallthru
          _
        %s1245 = sand.u32 %s288, 1
        %s1246 = scalar_lea.sflag [#allocation4], %s1245
        %s1247 = sand.u32 %s288, 1
        %s1248 = smul.addr %s1247, 16
        %s1249 = scalar_lea.vmem [#allocation6], %s1248
        // Predicated region
        $region77: #{tpu_custom_call.1} parent=63 // pred_check
          %p1250 = pneg %p298
        $region78: #{tpu_custom_call.1} parent=63 // pred_check_branch
          %1252 = sbr.rel (%p1250) target = $region80
        $region79: #{tpu_custom_call.1} parent=63 // pred_region
          %s1254 = ssub.s32 256, 256
          %1255 = vsyncadd %s1246, %s1254
          %s1256 = smul.addr %s29, 2
          %s1257 = smul.addr %s1256, 128
          %s1258 = scalar_lea.hbm %s11, %s1257
          %s1259 = sshll.u32 %s1249, 4
          %s1260 = int_to_ptr.vmem [resolvable:$true] %s1259
          %1265 = dma.vmem_to_hbm [thread:$0]  %s1260, 256, %s1258, %s1246, 128, 128, 8
        $region80: #{tpu_custom_call.1} parent=63 // pred_fallthru
          _
        // Predicated region
        $region81: #{tpu_custom_call.1} parent=63 // pred_check
          %p1266 = pneg %p319
        $region82: #{tpu_custom_call.1} parent=63 // pred_check_branch
          %1268 = sbr.rel (%p1266) target = $region84
        $region83: #{tpu_custom_call.1} parent=63 // pred_region
          %s1270 = ssub.s32 256, 256
          %1271 = vsyncadd [#allocation8], %s1270
          %s1272 = sshll.u32 [#allocation7], 4
          %s1273 = int_to_ptr.vmem [resolvable:$true] %s1272
          %1278 = dma.vmem_to_hbm [thread:$0]  %s1273, 256, %s12, [#allocation8], 128, 128, 8
        $region84: #{tpu_custom_call.1} parent=63 // pred_fallthru
          _
        // Predicated region
        $region85: #{tpu_custom_call.1} parent=63 // pred_check
          %p1279 = pneg %p319
        $region86: #{tpu_custom_call.1} parent=63 // pred_check_branch
          %1281 = sbr.rel (%p1279) target = $region88
        $region87: #{tpu_custom_call.1} parent=63 // pred_region
          %1282 = dma.done [#allocation8], 256
        $region88: #{tpu_custom_call.1} parent=63 // pred_fallthru
          _
      $region64: #{tpu_custom_call.1} parent=5 // pred_fallthru
        _
      %p1283 = scmp.le.s32.totalorder 2, %s24
      // Predicated region
      $region89: #{tpu_custom_call.1} parent=5 // pred_check
        %p1284 = pneg %p1283
      $region90: #{tpu_custom_call.1} parent=5 // pred_check_branch
        %1286 = sbr.rel (%p1284) target = $region92
      $region91: #{tpu_custom_call.1} parent=5 // pred_region
        %s1287 = ssub.s32 %s24, 2
        // Predicated region
        $region93: #{tpu_custom_call.1} parent=91 // pred_check
          %p1288 = pneg %p304
        $region94: #{tpu_custom_call.1} parent=91 // pred_check_branch
          %1290 = sbr.rel (%p1288) target = $region96
        $region95: #{tpu_custom_call.1} parent=91 // pred_region
          %s1291 = sand.u32 %s289, 1
          %s1292 = scalar_lea.sflag [#allocation4], %s1291
          %s1293 = sand.u32 %s289, 1
          %s1294 = smul.addr %s1293, 16
          %s1295 = scalar_lea.vmem [#allocation6], %s1294
          %1296 = dma.done %s1292, 256
        $region96: #{tpu_custom_call.1} parent=91 // pred_fallthru
          _
      $region92: #{tpu_custom_call.1} parent=5 // pred_fallthru
        _
    $region6: #{tpu_custom_call.1} parent=1 // loop_footer
      %s28 = sadd.s32 1, %s24
    $region7: #{tpu_custom_call.1} parent=1 // loop_footer_branch
      %23 = sbr.rel target = $region3
    $region8: #{tpu_custom_call.1} parent=1 // loop_exit
      _
    %1297 = vsyncpa [#allocation4], 1
    %s1298 = scalar_lea.sflag [#allocation4], 1
    %1299 = vsyncpa %s1298, 1
    %1300 = vsyncpa [#allocation8], 1
    %1301 = vsyncpa [#allocation5], 1
    %s1302 = scalar_lea.sflag [#allocation5], 1
    %1303 = vsyncpa %s1302, 1

</llo_original>
